<compile_context>
chip_gen: v6e
topology: v6e:2x2x1
jax: 0.10.0
libtpu: 0.0.40
codegen_flags: <defaults>
</compile_context>

<pallas_src>
import functools
import math
import re

import jax
import jax.numpy as jnp
from jax.experimental import pallas as pl
from jax.experimental.pallas import tpu as pltpu


# ---------------------------------------------------------------------------
# Kernels
# ---------------------------------------------------------------------------

def _pack_output(out, lane_dense, out_dtype):
    """(G, tq, D) f32 -> output block; optionally pack heads onto the lane axis."""
    if lane_dense:
        g, tq, d = out.shape
        out = jnp.swapaxes(out, 0, 1).reshape(tq, g * d)[None]   # (1, tq, G*D)
    return out.astype(out_dtype)


def _sdp_single_kv_kernel(q_ref, k_ref, v_ref, o_ref, *, scale, exp_dtype,
                          lane_dense):
    """Fast path: all of K/V fits one tile -> plain block softmax, no scratch."""
    q = q_ref[...]                       # (G, tq, D)  bf16 -> MXU
    k = k_ref[...]                       # (G, tk, D)
    v = v_ref[...]                       # (G, tk, D)

    s = jnp.einsum("gqd,gkd->gqk", q, k, preferred_element_type=jnp.float32)
    s = s * scale
    m = jnp.max(s, axis=-1, keepdims=True)
    p = jnp.exp((s - m).astype(exp_dtype))
    denom = jnp.sum(p.astype(jnp.float32), axis=-1, keepdims=True)
    pv = jnp.einsum("gqk,gkd->gqd", p.astype(v.dtype), v,
                    preferred_element_type=jnp.float32)
    out = pv * pl.reciprocal(denom, approx=False)
    o_ref[...] = _pack_output(out, lane_dense, o_ref.dtype)


def _flash_sdp_kernel(q_ref, k_ref, v_ref, o_ref, m_sc, l_sc, acc_sc, *,
                      scale, exp_dtype, lane_dense):
    """Online-softmax step over one (G heads, tq queries) x (tk keys) tile."""
    kv = pl.program_id(2)

    @pl.when(kv == 0)
    def _init():
        m_sc[...] = jnp.full(m_sc.shape, -jnp.inf, dtype=m_sc.dtype)
        l_sc[...] = jnp.zeros(l_sc.shape, dtype=l_sc.dtype)
        acc_sc[...] = jnp.zeros(acc_sc.shape, dtype=acc_sc.dtype)

    q = q_ref[...]                       # (G, tq, D)  native/bf16 -> MXU
    k = k_ref[...]                       # (G, tk, D)
    v = v_ref[...]                       # (G, tk, D)

    s = jnp.einsum("gqd,gkd->gqk", q, k, preferred_element_type=jnp.float32)
    s = s * scale                        # (q/h)(k/h)^T == (q k^T)/sqrt(D)

    m_prev = m_sc[...]
    m_new = jnp.maximum(m_prev, jnp.max(s, axis=-1, keepdims=True))
    alpha = jnp.exp(m_prev - m_new)
    p = jnp.exp((s - m_new).astype(exp_dtype))   # bf16 on the EUP for v6e/v7x

    l_sc[...] = alpha * l_sc[...] + jnp.sum(p.astype(jnp.float32), axis=-1,
                                            keepdims=True)
    acc_sc[...] = alpha * acc_sc[...] + jnp.einsum(
        "gqk,gkd->gqd", p.astype(v.dtype), v, preferred_element_type=jnp.float32)
    m_sc[...] = m_new

    @pl.when(kv == pl.num_programs(2) - 1)
    def _finalize():
        out = acc_sc[...] * pl.reciprocal(l_sc[...], approx=False)
        o_ref[...] = _pack_output(out, lane_dense, o_ref.dtype)


# ---------------------------------------------------------------------------
# Wrapper / tiling heuristics
# ---------------------------------------------------------------------------

def _tpu_generation():
    try:
        kind = jax.devices()[0].device_kind
    except Exception:
        return 6
    m = re.search(r"(\d+)", kind)
    return int(m.group(1)) if m else 6


def _vmem_capacity_bytes(gen):
    try:
        return int(pltpu.get_tpu_info().vmem_capacity_bytes)
    except Exception:
        return (64 if gen >= 7 else 128) * 1024 * 1024


def _pick_tile(n, prefs):
    for cand in prefs:
        if n >= cand and n % cand == 0:
            return cand
    return n   # small/odd extents: full-extent block is always layout-legal


def _vmem_footprint_bytes(g, tq, tk, d, itemsize):
    # double-buffered q + k/v blocks (compute dtype) and output block (f32-ish)
    io = 2 * ((g * tq * d + 2 * g * tk * d) * itemsize + g * tq * d * 4)
    scratch = g * tq * (2 + d) * 4          # persistent f32 m, l, acc
    temps = 3 * g * tq * tk * 4             # f32 score-block temporaries
    return io + scratch + temps


def raw_sdp_pallas(query, key, value, *, kv_tile=None):
    """query/key/value: (B, H, S, D). Returns (B, H, Sq, D) in query.dtype."""
    B, H, Sq, D = query.shape
    Skv = key.shape[-2]
    BH = B * H
    out_dtype = query.dtype
    scale = 1.0 / math.sqrt(D)

    # Feed the MXU bf16 (f32 matmul is emulated multi-pass on all current TPUs,
    # and v7x has no f32/int MXU path at all); accumulation stays f32.
    compute_dtype = jnp.bfloat16 if query.dtype == jnp.float32 else query.dtype
    q = query.reshape(BH, Sq, D).astype(compute_dtype)
    k = key.reshape(BH, Skv, D).astype(compute_dtype)
    v = value.reshape(BH, Skv, D).astype(compute_dtype)
    itemsize = jnp.dtype(compute_dtype).itemsize

    gen = _tpu_generation()
    vmem_cap = _vmem_capacity_bytes(gen)
    vmem_limit = min(int(0.75 * vmem_cap), 96 * 1024 * 1024)   # 96 MiB v5e/v6e, 48 MiB v7x
    budget = min(int(0.45 * vmem_cap), 56 * 1024 * 1024)       # 56 MiB v5e/v6e, ~28 MiB v7x

    # v5e's EUP has no bf16; v6e/v7x roughly halve EUP cost with bf16 exp.
    exp_dtype = (jnp.bfloat16
                 if gen >= 6 and compute_dtype == jnp.bfloat16 else jnp.float32)

    tq = _pick_tile(Sq, (512, 256, 128))
    kv_prefs = (256, 128) if gen >= 7 else (512, 256, 128)   # v7x: spend VMEM on tq
    tk = (kv_tile if (kv_tile is not None and Skv % kv_tile == 0)
          else _pick_tile(Skv, kv_prefs))
    # TODO(synk): Sq/Skv not divisible by 128 fall back to full-extent tiles;
    # padding + masking of padded keys would bound the f32 score temporaries.

    n_q_tiles = Sq // tq
    n_kv_steps = Skv // tk

    # Heads per grid step: largest divisor of BH inside the VMEM budget,
    # preferring lane-dense packing (G*D % 128 == 0) and, on v7x, an even
    # parallel iteration space across the two TensorCores.
    G, best = 1, None
    for g in range(1, BH + 1):
        if BH % g or _vmem_footprint_bytes(g, tq, tk, D, itemsize) > budget:
            continue
        lane_ok = (g * D) % 128 == 0
        even_split = ((BH // g) * n_q_tiles) % 2 == 0 if gen >= 7 else True
        cand = (lane_ok, even_split, g)
        if best is None or cand > best:
            best, G = cand, g
    n_groups = BH // G

    lane_dense = (D % 128 != 0) and ((G * D) % 128 == 0)

    cost = pl.CostEstimate(
        flops=4 * BH * Sq * Skv * D,
        transcendentals=BH * Sq * Skv,
        bytes_accessed=(itemsize * (q.size + n_q_tiles * (k.size + v.size))
                        + jnp.dtype(out_dtype).itemsize * BH * Sq * D),
    )

    def run(pack_heads, deep_kv_buffering):
        if pack_heads:
            out_shape = jax.ShapeDtypeStruct((n_groups, Sq, G * D), out_dtype)
            out_block = (1, tq, G * D)
        else:
            out_shape = jax.ShapeDtypeStruct((BH, Sq, D), out_dtype)
            out_block = (G, tq, D)

        if n_kv_steps == 1:
            grid = (n_groups, n_q_tiles)
            kernel = functools.partial(_sdp_single_kv_kernel, scale=scale,
                                       exp_dtype=exp_dtype, lane_dense=pack_heads)
            q_spec = pl.BlockSpec((G, tq, D), lambda g, qi: (g, qi, 0))
            kv_index = lambda g, qi: (g, 0, 0)
            out_spec = pl.BlockSpec(out_block, lambda g, qi: (g, qi, 0))
            scratch = []
            dims = ("parallel", "parallel")
        else:
            grid = (n_groups, n_q_tiles, n_kv_steps)        # KV reduction last
            kernel = functools.partial(_flash_sdp_kernel, scale=scale,
                                       exp_dtype=exp_dtype, lane_dense=pack_heads)
            q_spec = pl.BlockSpec((G, tq, D), lambda g, qi, ki: (g, qi, 0))
            kv_index = lambda g, qi, ki: (g, ki, 0)
            out_spec = pl.BlockSpec(out_block, lambda g, qi, ki: (g, qi, 0))
            scratch = [pltpu.VMEM((G, tq, 1), jnp.float32),   # running max m
                       pltpu.VMEM((G, tq, 1), jnp.float32),   # running sum l
                       pltpu.VMEM((G, tq, D), jnp.float32)]   # output accumulator
            dims = ("parallel", "parallel", "arbitrary")

        # v5e: lowest HBM BW; deepen the K/V pipeline when kv steps are short.
        def make_kv_spec():
            if deep_kv_buffering and gen == 5 and tq <= 256 and n_kv_steps >= 3:
                return pl.BlockSpec((G, tk, D), kv_index,
                                    pipeline_mode=pl.Buffered(3))
            return pl.BlockSpec((G, tk, D), kv_index)

        out = pl.pallas_call(
            kernel,
            out_shape=out_shape,
            grid_spec=pltpu.PrefetchScalarGridSpec(
                num_scalar_prefetch=0,
                grid=grid,
                in_specs=[q_spec, make_kv_spec(), make_kv_spec()],
                out_specs=out_spec,
                scratch_shapes=scratch,
            ),
            compiler_params=pltpu.CompilerParams(
                dimension_semantics=dims,
                vmem_limit_bytes=vmem_limit,
            ),
            cost_estimate=cost,
        )(q, k, v)

        if pack_heads:
            # Unpack the heads-on-lanes slab back to (B, H, Sq, D).
            out = jnp.transpose(out.reshape(n_groups, Sq, G, D), (0, 2, 1, 3))
        return out.reshape(B, H, Sq, D)

    try:
        return run(lane_dense, True)
    except Exception:
        # TODO(synk): the lane-dense head packing requires an in-kernel relayout
        # (swapaxes + minor-dim reshape) that some Mosaic versions reject; fall
        # back to the plain per-head output layout / default pipelining then.
        return run(False, False)


def raw_sdp_reference(query, key, value):
    """Plain-JAX reference mirroring the PyTorch module (no mask / no dropout)."""
    D = query.shape[-1]
    half_sqrt = math.sqrt(math.sqrt(D))
    attn = jnp.einsum("bhqd,bhkd->bhqk",
                      (query / half_sqrt).astype(jnp.float32),
                      (key / half_sqrt).astype(jnp.float32))
    attn = jax.nn.softmax(attn, axis=-1).astype(query.dtype)
    return jnp.einsum("bhqk,bhkd->bhqd", attn, value)


if __name__ == "__main__":
    # Shapes consistent with the module's demo: batch=2, heads=4, seq=8, head_dim=32.
    B, H, S, D = 2, 4, 8, 32
    rng = jax.random.PRNGKey(0)
    kq, kk, kv_ = jax.random.split(rng, 3)
    query = jax.random.normal(kq, (B, H, S, D), dtype=jnp.float32)
    key_ = jax.random.normal(kk, (B, H, S, D), dtype=jnp.float32)
    value = jax.random.normal(kv_, (B, H, S, D), dtype=jnp.float32)

    out = raw_sdp_pallas(query, key_, value)
    jax.block_until_ready(out)
    ref = raw_sdp_reference(query, key_, value)
    assert out.shape == ref.shape and out.dtype == query.dtype
    # MXU operands are fed in bf16 -> compare at bf16-level tolerance.
    err = float(jnp.max(jnp.abs(out.astype(jnp.float32) - ref.astype(jnp.float32))))
    assert err < 6e-2, f"single-KV-tile path mismatch vs reference (max abs err {err})"

    # Also exercise the multi-KV-tile online-softmax path with a tiny forced tile.
    B2, H2, S2 = 2, 2, 16
    k1, k2, k3 = jax.random.split(jax.random.PRNGKey(1), 3)
    q2 = jax.random.normal(k1, (B2, H2, S2, D), dtype=jnp.float32)
    key2 = jax.random.normal(k2, (B2, H2, S2, D), dtype=jnp.float32)
    val2 = jax.random.normal(k3, (B2, H2, S2, D), dtype=jnp.float32)
    out2 = raw_sdp_pallas(q2, key2, val2, kv_tile=8)
    jax.block_until_ready(out2)
    ref2 = raw_sdp_reference(q2, key2, val2)
    err2 = float(jnp.max(jnp.abs(out2.astype(jnp.float32) - ref2.astype(jnp.float32))))
    assert err2 < 6e-2, f"flash path mismatch vs reference (max abs err {err2})"

    # TODO(synk): attn_mask / causal-mask / dropout branches of the module are
    # not implemented (defaults None / 0.0 / False); a bool or additive mask
    # could be fused into the score block before the online-softmax update.
    print("KERNEL_OK")
</pallas_src>

<mosaic_0001>
module attributes {stable_mosaic.version = 11 : i64} {
  func.func @_sdp_single_kv_kernel(%arg0: i32, %arg1: i32, %arg2: memref<8x8x32xbf16, #tpu.memory_space<vmem>>, %arg3: memref<8x8x32xbf16, #tpu.memory_space<vmem>>, %arg4: memref<8x8x32xbf16, #tpu.memory_space<vmem>>, %arg5: memref<1x8x256xf32, #tpu.memory_space<vmem>>) attributes {dimension_semantics = [#tpu.dimension_semantics<parallel>, #tpu.dimension_semantics<parallel>], iteration_bounds = array<i64: 1, 1>, scalar_prefetch = 0 : i64, scratch_operands = 0 : i64, tpu.core_type = #tpu.core_type<tc>, window_params = [{transform_indices = @transform_0, window_bounds = array<i64: 8, 8, 32>}, {transform_indices = @transform_1, window_bounds = array<i64: 8, 8, 32>}, {transform_indices = @transform_2, window_bounds = array<i64: 8, 8, 32>}, {transform_indices = @transform_3, window_bounds = array<i64: 1, 8, 256>}]} {
    %c0 = arith.constant 0 : index
    %c0_0 = arith.constant 0 : index
    %c0_1 = arith.constant 0 : index
    %0 = vector.load %arg2[%c0, %c0_0, %c0_1] : memref<8x8x32xbf16, #tpu.memory_space<vmem>>, vector<8x8x32xbf16>
    %c0_2 = arith.constant 0 : index
    %c0_3 = arith.constant 0 : index
    %c0_4 = arith.constant 0 : index
    %1 = vector.load %arg3[%c0_2, %c0_3, %c0_4] : memref<8x8x32xbf16, #tpu.memory_space<vmem>>, vector<8x8x32xbf16>
    %c0_5 = arith.constant 0 : index
    %c0_6 = arith.constant 0 : index
    %c0_7 = arith.constant 0 : index
    %2 = vector.load %arg4[%c0_5, %c0_6, %c0_7] : memref<8x8x32xbf16, #tpu.memory_space<vmem>>, vector<8x8x32xbf16>
    "tpu.trace_start"() <{level = 10 : i32, message = "gqd,gkd->gqk"}> : () -> ()
    %cst = arith.constant dense<0.000000e+00> : vector<8x8x8xf32>
    %3 = tpu.matmul %0, %1, %cst {dimension_numbers = #tpu.dot_dimension_numbers<[2], [2], [1], [1], [0, 0, 0, 1, 1, 1], [0], [0]>} : vector<8x8x32xbf16>, vector<8x8x32xbf16>, vector<8x8x8xf32> -> vector<8x8x8xf32>
    "tpu.trace_stop"() : () -> ()
    %cst_8 = arith.constant 0.176776692 : f32
    %4 = vector.broadcast %cst_8 : f32 to vector<8x8x8xf32>
    %5 = arith.mulf %3, %4 : vector<8x8x8xf32>
    %cst_9 = arith.constant dense<0xFF800000> : vector<8x8xf32>
    %6 = vector.multi_reduction <maximumf>, %5, %cst_9 [2] : vector<8x8x8xf32> to vector<8x8xf32>
    %7 = vector.shape_cast %6 : vector<8x8xf32> to vector<8x8x1xf32>
    %8 = vector.broadcast %7 : vector<8x8x1xf32> to vector<8x8x8xf32>
    %9 = arith.subf %5, %8 : vector<8x8x8xf32>
    %10 = arith.truncf %9 : vector<8x8x8xf32> to vector<8x8x8xbf16>
    %11 = math.exp %10 : vector<8x8x8xbf16>
    %12 = arith.extf %11 : vector<8x8x8xbf16> to vector<8x8x8xf32>
    %cst_10 = arith.constant dense<0.000000e+00> : vector<8x8xf32>
    %13 = vector.multi_reduction <add>, %12, %cst_10 [2] : vector<8x8x8xf32> to vector<8x8xf32>
    %14 = vector.shape_cast %13 : vector<8x8xf32> to vector<8x8x1xf32>
    "tpu.trace_start"() <{level = 10 : i32, message = "gqk,gkd->gqd"}> : () -> ()
    %cst_11 = arith.constant dense<0.000000e+00> : vector<8x8x32xf32>
    %15 = tpu.matmul %11, %2, %cst_11 {dimension_numbers = #tpu.dot_dimension_numbers<[2], [1], [1], [2], [0, 0, 0, 1, 1, 2], [0], [0]>} : vector<8x8x8xbf16>, vector<8x8x32xbf16>, vector<8x8x32xf32> -> vector<8x8x32xf32>
    "tpu.trace_stop"() : () -> ()
    %16 = tpu.reciprocal %14 : vector<8x8x1xf32> -> vector<8x8x1xf32>
    %17 = vector.broadcast %16 : vector<8x8x1xf32> to vector<8x8x32xf32>
    %18 = arith.mulf %15, %17 : vector<8x8x32xf32>
    %19 = tpu.transpose %18, [1, 0, 2] : vector<8x8x32xf32> -> vector<8x8x32xf32>
    %20 = vector.shape_cast %19 : vector<8x8x32xf32> to vector<8x256xf32>
    %21 = vector.shape_cast %20 : vector<8x256xf32> to vector<1x8x256xf32>
    %c0_12 = arith.constant 0 : index
    %c0_13 = arith.constant 0 : index
    %c0_14 = arith.constant 0 : index
    %22 = vector.load %arg5[%c0_12, %c0_13, %c0_14] : memref<1x8x256xf32, #tpu.memory_space<vmem>>, vector<1x8x256xf32>
    tpu.vector_store %arg5[%c0_12, %c0_13, %c0_14], %21 {strides = array<i32>} : memref<1x8x256xf32, #tpu.memory_space<vmem>>, vector<1x8x256xf32>,
    return
  }
  func.func @transform_0(%arg0: i32, %arg1: i32) -> (i32, i32, i32) {
    %c0_i32 = arith.constant 0 : i32
    %c0_i32_0 = arith.constant 0 : i32
    return %arg0, %arg1, %c0_i32 : i32, i32, i32
  }
  func.func @transform_1(%arg0: i32, %arg1: i32) -> (i32, i32, i32) {
    %c0_i32 = arith.constant 0 : i32
    %c0_i32_0 = arith.constant 0 : i32
    %c0_i32_1 = arith.constant 0 : i32
    return %arg0, %c0_i32, %c0_i32_0 : i32, i32, i32
  }
  func.func @transform_2(%arg0: i32, %arg1: i32) -> (i32, i32, i32) {
    %c0_i32 = arith.constant 0 : i32
    %c0_i32_0 = arith.constant 0 : i32
    %c0_i32_1 = arith.constant 0 : i32
    return %arg0, %c0_i32, %c0_i32_0 : i32, i32, i32
  }
  func.func @transform_3(%arg0: i32, %arg1: i32) -> (i32, i32, i32) {
    %c0_i32 = arith.constant 0 : i32
    %c0_i32_0 = arith.constant 0 : i32
    return %arg0, %arg1, %c0_i32 : i32, i32, i32
  }
}

module attributes {stable_mosaic.version = 11 : i64} {
  func.func @_sdp_single_kv_kernel(%arg0: i32, %arg1: i32, %arg2: memref<8x8x32xbf16, #tpu.memory_space<vmem>>, %arg3: memref<8x8x32xbf16, #tpu.memory_space<vmem>>, %arg4: memref<8x8x32xbf16, #tpu.memory_space<vmem>>, %arg5: memref<8x8x32xf32, #tpu.memory_space<vmem>>) attributes {dimension_semantics = [#tpu.dimension_semantics<parallel>, #tpu.dimension_semantics<parallel>], iteration_bounds = array<i64: 1, 1>, scalar_prefetch = 0 : i64, scratch_operands = 0 : i64, tpu.core_type = #tpu.core_type<tc>, window_params = [{transform_indices = @transform_0, window_bounds = array<i64: 8, 8, 32>}, {transform_indices = @transform_1, window_bounds = array<i64: 8, 8, 32>}, {transform_indices = @transform_2, window_bounds = array<i64: 8, 8, 32>}, {transform_indices = @transform_3, window_bounds = array<i64: 8, 8, 32>}]} {
    %c0 = arith.constant 0 : index
    %c0_0 = arith.constant 0 : index
    %c0_1 = arith.constant 0 : index
    %0 = vector.load %arg2[%c0, %c0_0, %c0_1] : memref<8x8x32xbf16, #tpu.memory_space<vmem>>, vector<8x8x32xbf16>
    %c0_2 = arith.constant 0 : index
    %c0_3 = arith.constant 0 : index
    %c0_4 = arith.constant 0 : index
    %1 = vector.load %arg3[%c0_2, %c0_3, %c0_4] : memref<8x8x32xbf16, #tpu.memory_space<vmem>>, vector<8x8x32xbf16>
    %c0_5 = arith.constant 0 : index
    %c0_6 = arith.constant 0 : index
    %c0_7 = arith.constant 0 : index
    %2 = vector.load %arg4[%c0_5, %c0_6, %c0_7] : memref<8x8x32xbf16, #tpu.memory_space<vmem>>, vector<8x8x32xbf16>
    "tpu.trace_start"() <{level = 10 : i32, message = "gqd,gkd->gqk"}> : () -> ()
    %cst = arith.constant dense<0.000000e+00> : vector<8x8x8xf32>
    %3 = tpu.matmul %0, %1, %cst {dimension_numbers = #tpu.dot_dimension_numbers<[2], [2], [1], [1], [0, 0, 0, 1, 1, 1], [0], [0]>} : vector<8x8x32xbf16>, vector<8x8x32xbf16>, vector<8x8x8xf32> -> vector<8x8x8xf32>
    "tpu.trace_stop"() : () -> ()
    %cst_8 = arith.constant 0.176776692 : f32
    %4 = vector.broadcast %cst_8 : f32 to vector<8x8x8xf32>
    %5 = arith.mulf %3, %4 : vector<8x8x8xf32>
    %cst_9 = arith.constant dense<0xFF800000> : vector<8x8xf32>
    %6 = vector.multi_reduction <maximumf>, %5, %cst_9 [2] : vector<8x8x8xf32> to vector<8x8xf32>
    %7 = vector.shape_cast %6 : vector<8x8xf32> to vector<8x8x1xf32>
    %8 = vector.broadcast %7 : vector<8x8x1xf32> to vector<8x8x8xf32>
    %9 = arith.subf %5, %8 : vector<8x8x8xf32>
    %10 = arith.truncf %9 : vector<8x8x8xf32> to vector<8x8x8xbf16>
    %11 = math.exp %10 : vector<8x8x8xbf16>
    %12 = arith.extf %11 : vector<8x8x8xbf16> to vector<8x8x8xf32>
    %cst_10 = arith.constant dense<0.000000e+00> : vector<8x8xf32>
    %13 = vector.multi_reduction <add>, %12, %cst_10 [2] : vector<8x8x8xf32> to vector<8x8xf32>
    %14 = vector.shape_cast %13 : vector<8x8xf32> to vector<8x8x1xf32>
    "tpu.trace_start"() <{level = 10 : i32, message = "gqk,gkd->gqd"}> : () -> ()
    %cst_11 = arith.constant dense<0.000000e+00> : vector<8x8x32xf32>
    %15 = tpu.matmul %11, %2, %cst_11 {dimension_numbers = #tpu.dot_dimension_numbers<[2], [1], [1], [2], [0, 0, 0, 1, 1, 2], [0], [0]>} : vector<8x8x8xbf16>, vector<8x8x32xbf16>, vector<8x8x32xf32> -> vector<8x8x32xf32>
    "tpu.trace_stop"() : () -> ()
    %16 = tpu.reciprocal %14 : vector<8x8x1xf32> -> vector<8x8x1xf32>
    %17 = vector.broadcast %16 : vector<8x8x1xf32> to vector<8x8x32xf32>
    %18 = arith.mulf %15, %17 : vector<8x8x32xf32>
    %c0_12 = arith.constant 0 : index
    %c0_13 = arith.constant 0 : index
    %c0_14 = arith.constant 0 : index
    %19 = vector.load %arg5[%c0_12, %c0_13, %c0_14] : memref<8x8x32xf32, #tpu.memory_space<vmem>>, vector<8x8x32xf32>
    tpu.vector_store %arg5[%c0_12, %c0_13, %c0_14], %18 {strides = array<i32>} : memref<8x8x32xf32, #tpu.memory_space<vmem>>, vector<8x8x32xf32>,
    return
  }
  func.func @transform_0(%arg0: i32, %arg1: i32) -> (i32, i32, i32) {
    %c0_i32 = arith.constant 0 : i32
    %c0_i32_0 = arith.constant 0 : i32
    return %arg0, %arg1, %c0_i32 : i32, i32, i32
  }
  func.func @transform_1(%arg0: i32, %arg1: i32) -> (i32, i32, i32) {
    %c0_i32 = arith.constant 0 : i32
    %c0_i32_0 = arith.constant 0 : i32
    %c0_i32_1 = arith.constant 0 : i32
    return %arg0, %c0_i32, %c0_i32_0 : i32, i32, i32
  }
  func.func @transform_2(%arg0: i32, %arg1: i32) -> (i32, i32, i32) {
    %c0_i32 = arith.constant 0 : i32
    %c0_i32_0 = arith.constant 0 : i32
    %c0_i32_1 = arith.constant 0 : i32
    return %arg0, %c0_i32, %c0_i32_0 : i32, i32, i32
  }
  func.func @transform_3(%arg0: i32, %arg1: i32) -> (i32, i32, i32) {
    %c0_i32 = arith.constant 0 : i32
    %c0_i32_0 = arith.constant 0 : i32
    return %arg0, %arg1, %c0_i32 : i32, i32, i32
  }
}

</mosaic_0001>

<llo_original>
// kernel: tpu_custom_call.1
$region0: #{tpu_custom_call.1}
  #allocation0 [shape = 'u32[]', space=smem, size = 0x4, offset = 0x4, fixed_abs, tag = 'smem constant byte address 0x4 - core index']
  #allocation1 [shape = 'u32[144,128]{1,0:T(1,128)}', space=vmem, size = 0x12000, scoped, tag = 'internal scratch']
  %s0 = inlined_call_operand.hbm [shape: bf16[8,8,32], index: 0, kind: input, shape index: {}]
  %s1 = inlined_call_operand.hbm [shape: bf16[8,8,32], index: 1, kind: input, shape index: {}]
  %s2 = inlined_call_operand.hbm [shape: bf16[8,8,32], index: 2, kind: input, shape index: {}]
  %s3 = inlined_call_operand.hbm [shape: f32[1,8,256], index: 3, kind: output, shape index: {}]
  %s4 = sld [smem:[#allocation0]]
  $region34: #{tpu_custom_call.1} parent=0
    _
  %s6 = ssub.s32 1, %s4
  %s7 = scalar_select 0, %s6, %s4
  $region1: #{tpu_custom_call.1} parent=0
    #allocation2 [shape = 'u8[16384]{0}', space=vmem, size = 0x4000, scoped, tag = 'input window, operand 0, single buffered']
    #allocation3 [shape = 's32[1]{0}', space=sflag, size = 0x4, scoped, tag = 'scoped memory for tpu_custom_call.1']
    #allocation4 [shape = 's32[1]{0}', space=sflag, size = 0x4, scoped, tag = 'scoped memory for tpu_custom_call.1']
    #allocation5 [shape = 'u8[16384]{0}', space=vmem, size = 0x4000, scoped, tag = 'input window, operand 1, single buffered']
    #allocation6 [shape = 's32[1]{0}', space=sflag, size = 0x4, scoped, tag = 'scoped memory for tpu_custom_call.1']
    #allocation7 [shape = 'u8[16384]{0}', space=vmem, size = 0x4000, scoped, tag = 'input window, operand 2, single buffered']
    #allocation8 [shape = 'u8[8192]{0}', space=vmem, size = 0x2000, scoped, tag = 'output window, operand 0, single buffered']
    %8 = vsyncpa [#allocation3], 0
    %9 = vsyncpa [#allocation6], 0
    %10 = vsyncpa [#allocation4], 0
    // Predicated region
    $region2: #{tpu_custom_call.1} parent=1 // pred_check
      _
    $region3: #{tpu_custom_call.1} parent=1 // pred_check_branch
      %12 = sbr.rel (0) target = $region5
    $region4: #{tpu_custom_call.1} parent=1 // pred_region
      %s14 = ssub.s32 512, 512
      %15 = vsyncadd [#allocation3], %s14
      %s16 = sshll.u32 [#allocation2], 4
      %s17 = int_to_ptr.vmem [resolvable:$true] %s16
      %22 = dma.hbm_to_vmem [thread:$0]  %s0, 512, %s17, [#allocation3], 64, 64, 4
    $region5: #{tpu_custom_call.1} parent=1 // pred_fallthru
      _
    // Predicated region
    $region6: #{tpu_custom_call.1} parent=1 // pred_check
      _
    $region7: #{tpu_custom_call.1} parent=1 // pred_check_branch
      %24 = sbr.rel (0) target = $region9
    $region8: #{tpu_custom_call.1} parent=1 // pred_region
      %s26 = ssub.s32 512, 512
      %27 = vsyncadd [#allocation6], %s26
      %s28 = sshll.u32 [#allocation5], 4
      %s29 = int_to_ptr.vmem [resolvable:$true] %s28
      %34 = dma.hbm_to_vmem [thread:$0]  %s1, 512, %s29, [#allocation6], 64, 64, 4
    $region9: #{tpu_custom_call.1} parent=1 // pred_fallthru
      _
    // Predicated region
    $region10: #{tpu_custom_call.1} parent=1 // pred_check
      _
    $region11: #{tpu_custom_call.1} parent=1 // pred_check_branch
      %36 = sbr.rel (0) target = $region13
    $region12: #{tpu_custom_call.1} parent=1 // pred_region
      %s38 = ssub.s32 512, 512
      %39 = vsyncadd [#allocation6], %s38
      %s40 = sshll.u32 [#allocation7], 4
      %s41 = int_to_ptr.vmem [resolvable:$true] %s40
      %46 = dma.hbm_to_vmem [thread:$0]  %s2, 512, %s41, [#allocation6], 64, 64, 4
    $region13: #{tpu_custom_call.1} parent=1 // pred_fallthru
      _
    // Predicated region
    $region14: #{tpu_custom_call.1} parent=1 // pred_check
      _
    $region15: #{tpu_custom_call.1} parent=1 // pred_check_branch
      %48 = sbr.rel (0) target = $region17
    $region16: #{tpu_custom_call.1} parent=1 // pred_region
      %49 = dma.done [#allocation3], 512
    $region17: #{tpu_custom_call.1} parent=1 // pred_fallthru
      _
    // Predicated region
    $region18: #{tpu_custom_call.1} parent=1 // pred_check
      _
    $region19: #{tpu_custom_call.1} parent=1 // pred_check_branch
      %51 = sbr.rel (0) target = $region21
    $region20: #{tpu_custom_call.1} parent=1 // pred_region
      %52 = dma.done [#allocation6], 512
    $region21: #{tpu_custom_call.1} parent=1 // pred_fallthru
      _
    // Predicated region
    $region22: #{tpu_custom_call.1} parent=1 // pred_check
      _
    $region23: #{tpu_custom_call.1} parent=1 // pred_check_branch
      %54 = sbr.rel (0) target = $region25
    $region24: #{tpu_custom_call.1} parent=1 // pred_region
      %55 = dma.done [#allocation6], 512
    $region25: #{tpu_custom_call.1} parent=1 // pred_fallthru
      _
    %v57 = vld [vmem:[#allocation2] sm:$0xf]
    %v58 = vld [vmem:[#allocation2 + $0x4] sm:$0xf]
    %v59 = vld [vmem:[#allocation2 + $0x8] sm:$0xf]
    %v60 = vld [vmem:[#allocation2 + $0xc] sm:$0xf]
    %v61 = vld [vmem:[#allocation2 + $0x10] sm:$0xf]
    %v62 = vld [vmem:[#allocation2 + $0x14] sm:$0xf]
    %v63 = vld [vmem:[#allocation2 + $0x18] sm:$0xf]
    %v64 = vld [vmem:[#allocation2 + $0x1c] sm:$0xf]
    %v65 = vld [vmem:[#allocation5] sm:$0xf]
    %v66 = vld [vmem:[#allocation5 + $0x4] sm:$0xf]
    %v67 = vld [vmem:[#allocation5 + $0x8] sm:$0xf]
    %v68 = vld [vmem:[#allocation5 + $0xc] sm:$0xf]
    %v69 = vld [vmem:[#allocation5 + $0x10] sm:$0xf]
    %v70 = vld [vmem:[#allocation5 + $0x14] sm:$0xf]
    %v71 = vld [vmem:[#allocation5 + $0x18] sm:$0xf]
    %v72 = vld [vmem:[#allocation5 + $0x1c] sm:$0xf]
    %v73 = vld [vmem:[#allocation7] sm:$0xf]
    %v74 = vld [vmem:[#allocation7 + $0x4] sm:$0xf]
    %v75 = vld [vmem:[#allocation7 + $0x8] sm:$0xf]
    %v76 = vld [vmem:[#allocation7 + $0xc] sm:$0xf]
    %v77 = vld [vmem:[#allocation7 + $0x10] sm:$0xf]
    %v78 = vld [vmem:[#allocation7 + $0x14] sm:$0xf]
    %v79 = vld [vmem:[#allocation7 + $0x18] sm:$0xf]
    %v80 = vld [vmem:[#allocation7 + $0x1c] sm:$0xf]
    %vm81 = vcmask 261120
    %v83 = vsel %vm81, %v57, 0
    %v86 = vsel %vm81, %v65, 0
    %88 = vmatprep.subr.bf16.mxu0 0
    %89 = vmatpush1.bf16.xpose.msra.mxu0 0
    %90 = vmatprep.subr.bf16.mxu0 0
    %91 = vmatpush1.bf16.xpose.msra.mxu0 0
    %92 = vmatprep.subr.bf16.mxu0 0
    %93 = vmatpush1.bf16.xpose.msra.mxu0 0
    %94 = vmatprep.subr.bf16.mxu0 0
    %95 = vmatpush1.bf16.xpose.msra.mxu0 0
    %96 = vmatprep.subr.bf16.mxu0 0
    %97 = vmatpush1.bf16.xpose.msra.mxu0 0
    %98 = vmatprep.subr.bf16.mxu0 0
    %99 = vmatpush1.bf16.xpose.msra.mxu0 0
    %100 = vmatprep.subr.bf16.mxu0 0
    %101 = vmatpush1.bf16.xpose.msra.mxu0 0
    %102 = vmatprep.subr.bf16.mxu0 0
    %103 = vmatpush1.bf16.xpose.msra.mxu0 %v86
    %104 = vmatprep.subr.bf16.mxu0 0
    %105 = vmatpush2.bf16.xpose.msra.mxu0 0
    %106 = vmatprep.subr.bf16.mxu0 0
    %107 = vmatpush2.bf16.xpose.msra.mxu0 0
    %108 = vmatprep.subr.bf16.mxu0 0
    %109 = vmatpush2.bf16.xpose.msra.mxu0 0
    %110 = vmatprep.subr.bf16.mxu0 0
    %111 = vmatpush2.bf16.xpose.msra.mxu0 0
    %112 = vmatprep.subr.bf16.mxu0 0
    %113 = vmatpush2.bf16.xpose.msra.mxu0 0
    %114 = vmatprep.subr.bf16.mxu0 0
    %115 = vmatpush2.bf16.xpose.msra.mxu0 0
    %116 = vmatprep.subr.bf16.mxu0 0
    %117 = vmatpush2.bf16.xpose.msra.mxu0 0
    %118 = vmatprep.subr.bf16.mxu0 0
    %119 = vmatpush2.bf16.xpose.msra.mxu0 0
    %120 = vmatprep.mubr.bf16.mxu0 0
    %121 = vmatmul.mubr.bf16.gmra.mxu0 %v83
    %v122 = vpop.f32.mrf.mxu0
    %v123 = vadd.f32 0.0, %v122
    %v124 = vpop.f32.mrf.mxu0
    %v125 = vpop.f32.mrf.mxu0
    %v126 = vpop.f32.mrf.mxu0
    %127 = vdwg.mxu0
    %v129 = vsel %vm81, %v58, 0
    %v132 = vsel %vm81, %v66, 0
    %134 = vmatprep.subr.bf16.mxu0 0
    %135 = vmatpush1.bf16.xpose.msra.mxu0 0
    %136 = vmatprep.subr.bf16.mxu0 0
    %137 = vmatpush1.bf16.xpose.msra.mxu0 0
    %138 = vmatprep.subr.bf16.mxu0 0
    %139 = vmatpush1.bf16.xpose.msra.mxu0 0
    %140 = vmatprep.subr.bf16.mxu0 0
    %141 = vmatpush1.bf16.xpose.msra.mxu0 0
    %142 = vmatprep.subr.bf16.mxu0 0
    %143 = vmatpush1.bf16.xpose.msra.mxu0 0
    %144 = vmatprep.subr.bf16.mxu0 0
    %145 = vmatpush1.bf16.xpose.msra.mxu0 0
    %146 = vmatprep.subr.bf16.mxu0 0
    %147 = vmatpush1.bf16.xpose.msra.mxu0 0
    %148 = vmatprep.subr.bf16.mxu0 0
    %149 = vmatpush1.bf16.xpose.msra.mxu0 %v132
    %150 = vmatprep.subr.bf16.mxu0 0
    %151 = vmatpush2.bf16.xpose.msra.mxu0 0
    %152 = vmatprep.subr.bf16.mxu0 0
    %153 = vmatpush2.bf16.xpose.msra.mxu0 0
    %154 = vmatprep.subr.bf16.mxu0 0
    %155 = vmatpush2.bf16.xpose.msra.mxu0 0
    %156 = vmatprep.subr.bf16.mxu0 0
    %157 = vmatpush2.bf16.xpose.msra.mxu0 0
    %158 = vmatprep.subr.bf16.mxu0 0
    %159 = vmatpush2.bf16.xpose.msra.mxu0 0
    %160 = vmatprep.subr.bf16.mxu0 0
    %161 = vmatpush2.bf16.xpose.msra.mxu0 0
    %162 = vmatprep.subr.bf16.mxu0 0
    %163 = vmatpush2.bf16.xpose.msra.mxu0 0
    %164 = vmatprep.subr.bf16.mxu0 0
    %165 = vmatpush2.bf16.xpose.msra.mxu0 0
    %166 = vmatprep.mubr.bf16.mxu0 0
    %167 = vmatmul.mubr.bf16.gmra.mxu0 %v129
    %v168 = vpop.f32.mrf.mxu0
    %v169 = vadd.f32 0.0, %v168
    %v170 = vpop.f32.mrf.mxu0
    %v171 = vpop.f32.mrf.mxu0
    %v172 = vpop.f32.mrf.mxu0
    %173 = vdwg.mxu0
    %v175 = vsel %vm81, %v59, 0
    %v178 = vsel %vm81, %v67, 0
    %180 = vmatprep.subr.bf16.mxu0 0
    %181 = vmatpush1.bf16.xpose.msra.mxu0 0
    %182 = vmatprep.subr.bf16.mxu0 0
    %183 = vmatpush1.bf16.xpose.msra.mxu0 0
    %184 = vmatprep.subr.bf16.mxu0 0
    %185 = vmatpush1.bf16.xpose.msra.mxu0 0
    %186 = vmatprep.subr.bf16.mxu0 0
    %187 = vmatpush1.bf16.xpose.msra.mxu0 0
    %188 = vmatprep.subr.bf16.mxu0 0
    %189 = vmatpush1.bf16.xpose.msra.mxu0 0
    %190 = vmatprep.subr.bf16.mxu0 0
    %191 = vmatpush1.bf16.xpose.msra.mxu0 0
    %192 = vmatprep.subr.bf16.mxu0 0
    %193 = vmatpush1.bf16.xpose.msra.mxu0 0
    %194 = vmatprep.subr.bf16.mxu0 0
    %195 = vmatpush1.bf16.xpose.msra.mxu0 %v178
    %196 = vmatprep.subr.bf16.mxu0 0
    %197 = vmatpush2.bf16.xpose.msra.mxu0 0
    %198 = vmatprep.subr.bf16.mxu0 0
    %199 = vmatpush2.bf16.xpose.msra.mxu0 0
    %200 = vmatprep.subr.bf16.mxu0 0
    %201 = vmatpush2.bf16.xpose.msra.mxu0 0
    %202 = vmatprep.subr.bf16.mxu0 0
    %203 = vmatpush2.bf16.xpose.msra.mxu0 0
    %204 = vmatprep.subr.bf16.mxu0 0
    %205 = vmatpush2.bf16.xpose.msra.mxu0 0
    %206 = vmatprep.subr.bf16.mxu0 0
    %207 = vmatpush2.bf16.xpose.msra.mxu0 0
    %208 = vmatprep.subr.bf16.mxu0 0
    %209 = vmatpush2.bf16.xpose.msra.mxu0 0
    %210 = vmatprep.subr.bf16.mxu0 0
    %211 = vmatpush2.bf16.xpose.msra.mxu0 0
    %212 = vmatprep.mubr.bf16.mxu0 0
    %213 = vmatmul.mubr.bf16.gmra.mxu0 %v175
    %v214 = vpop.f32.mrf.mxu0
    %v215 = vadd.f32 0.0, %v214
    %v216 = vpop.f32.mrf.mxu0
    %v217 = vpop.f32.mrf.mxu0
    %v218 = vpop.f32.mrf.mxu0
    %219 = vdwg.mxu0
    %v221 = vsel %vm81, %v60, 0
    %v224 = vsel %vm81, %v68, 0
    %226 = vmatprep.subr.bf16.mxu0 0
    %227 = vmatpush1.bf16.xpose.msra.mxu0 0
    %228 = vmatprep.subr.bf16.mxu0 0
    %229 = vmatpush1.bf16.xpose.msra.mxu0 0
    %230 = vmatprep.subr.bf16.mxu0 0
    %231 = vmatpush1.bf16.xpose.msra.mxu0 0
    %232 = vmatprep.subr.bf16.mxu0 0
    %233 = vmatpush1.bf16.xpose.msra.mxu0 0
    %234 = vmatprep.subr.bf16.mxu0 0
    %235 = vmatpush1.bf16.xpose.msra.mxu0 0
    %236 = vmatprep.subr.bf16.mxu0 0
    %237 = vmatpush1.bf16.xpose.msra.mxu0 0
    %238 = vmatprep.subr.bf16.mxu0 0
    %239 = vmatpush1.bf16.xpose.msra.mxu0 0
    %240 = vmatprep.subr.bf16.mxu0 0
    %241 = vmatpush1.bf16.xpose.msra.mxu0 %v224
    %242 = vmatprep.subr.bf16.mxu0 0
    %243 = vmatpush2.bf16.xpose.msra.mxu0 0
    %244 = vmatprep.subr.bf16.mxu0 0
    %245 = vmatpush2.bf16.xpose.msra.mxu0 0
    %246 = vmatprep.subr.bf16.mxu0 0
    %247 = vmatpush2.bf16.xpose.msra.mxu0 0
    %248 = vmatprep.subr.bf16.mxu0 0
    %249 = vmatpush2.bf16.xpose.msra.mxu0 0
    %250 = vmatprep.subr.bf16.mxu0 0
    %251 = vmatpush2.bf16.xpose.msra.mxu0 0
    %252 = vmatprep.subr.bf16.mxu0 0
    %253 = vmatpush2.bf16.xpose.msra.mxu0 0
    %254 = vmatprep.subr.bf16.mxu0 0
    %255 = vmatpush2.bf16.xpose.msra.mxu0 0
    %256 = vmatprep.subr.bf16.mxu0 0
    %257 = vmatpush2.bf16.xpose.msra.mxu0 0
    %258 = vmatprep.mubr.bf16.mxu0 0
    %259 = vmatmul.mubr.bf16.gmra.mxu0 %v221
    %v260 = vpop.f32.mrf.mxu0
    %v261 = vadd.f32 0.0, %v260
    %v262 = vpop.f32.mrf.mxu0
    %v263 = vpop.f32.mrf.mxu0
    %v264 = vpop.f32.mrf.mxu0
    %265 = vdwg.mxu0
    %v267 = vsel %vm81, %v61, 0
    %v270 = vsel %vm81, %v69, 0
    %272 = vmatprep.subr.bf16.mxu0 0
    %273 = vmatpush1.bf16.xpose.msra.mxu0 0
    %274 = vmatprep.subr.bf16.mxu0 0
    %275 = vmatpush1.bf16.xpose.msra.mxu0 0
    %276 = vmatprep.subr.bf16.mxu0 0
    %277 = vmatpush1.bf16.xpose.msra.mxu0 0
    %278 = vmatprep.subr.bf16.mxu0 0
    %279 = vmatpush1.bf16.xpose.msra.mxu0 0
    %280 = vmatprep.subr.bf16.mxu0 0
    %281 = vmatpush1.bf16.xpose.msra.mxu0 0
    %282 = vmatprep.subr.bf16.mxu0 0
    %283 = vmatpush1.bf16.xpose.msra.mxu0 0
    %284 = vmatprep.subr.bf16.mxu0 0
    %285 = vmatpush1.bf16.xpose.msra.mxu0 0
    %286 = vmatprep.subr.bf16.mxu0 0
    %287 = vmatpush1.bf16.xpose.msra.mxu0 %v270
    %288 = vmatprep.subr.bf16.mxu0 0
    %289 = vmatpush2.bf16.xpose.msra.mxu0 0
    %290 = vmatprep.subr.bf16.mxu0 0
    %291 = vmatpush2.bf16.xpose.msra.mxu0 0
    %292 = vmatprep.subr.bf16.mxu0 0
    %293 = vmatpush2.bf16.xpose.msra.mxu0 0
    %294 = vmatprep.subr.bf16.mxu0 0
    %295 = vmatpush2.bf16.xpose.msra.mxu0 0
    %296 = vmatprep.subr.bf16.mxu0 0
    %297 = vmatpush2.bf16.xpose.msra.mxu0 0
    %298 = vmatprep.subr.bf16.mxu0 0
    %299 = vmatpush2.bf16.xpose.msra.mxu0 0
    %300 = vmatprep.subr.bf16.mxu0 0
    %301 = vmatpush2.bf16.xpose.msra.mxu0 0
    %302 = vmatprep.subr.bf16.mxu0 0
    %303 = vmatpush2.bf16.xpose.msra.mxu0 0
    %304 = vmatprep.mubr.bf16.mxu0 0
    %305 = vmatmul.mubr.bf16.gmra.mxu0 %v267
    %v306 = vpop.f32.mrf.mxu0
    %v307 = vadd.f32 0.0, %v306
    %v308 = vpop.f32.mrf.mxu0
    %v309 = vpop.f32.mrf.mxu0
    %v310 = vpop.f32.mrf.mxu0
    %311 = vdwg.mxu0
    %v313 = vsel %vm81, %v62, 0
    %v316 = vsel %vm81, %v70, 0
    %318 = vmatprep.subr.bf16.mxu0 0
    %319 = vmatpush1.bf16.xpose.msra.mxu0 0
    %320 = vmatprep.subr.bf16.mxu0 0
    %321 = vmatpush1.bf16.xpose.msra.mxu0 0
    %322 = vmatprep.subr.bf16.mxu0 0
    %323 = vmatpush1.bf16.xpose.msra.mxu0 0
    %324 = vmatprep.subr.bf16.mxu0 0
    %325 = vmatpush1.bf16.xpose.msra.mxu0 0
    %326 = vmatprep.subr.bf16.mxu0 0
    %327 = vmatpush1.bf16.xpose.msra.mxu0 0
    %328 = vmatprep.subr.bf16.mxu0 0
    %329 = vmatpush1.bf16.xpose.msra.mxu0 0
    %330 = vmatprep.subr.bf16.mxu0 0
    %331 = vmatpush1.bf16.xpose.msra.mxu0 0
    %332 = vmatprep.subr.bf16.mxu0 0
    %333 = vmatpush1.bf16.xpose.msra.mxu0 %v316
    %334 = vmatprep.subr.bf16.mxu0 0
    %335 = vmatpush2.bf16.xpose.msra.mxu0 0
    %336 = vmatprep.subr.bf16.mxu0 0
    %337 = vmatpush2.bf16.xpose.msra.mxu0 0
    %338 = vmatprep.subr.bf16.mxu0 0
    %339 = vmatpush2.bf16.xpose.msra.mxu0 0
    %340 = vmatprep.subr.bf16.mxu0 0
    %341 = vmatpush2.bf16.xpose.msra.mxu0 0
    %342 = vmatprep.subr.bf16.mxu0 0
    %343 = vmatpush2.bf16.xpose.msra.mxu0 0
    %344 = vmatprep.subr.bf16.mxu0 0
    %345 = vmatpush2.bf16.xpose.msra.mxu0 0
    %346 = vmatprep.subr.bf16.mxu0 0
    %347 = vmatpush2.bf16.xpose.msra.mxu0 0
    %348 = vmatprep.subr.bf16.mxu0 0
    %349 = vmatpush2.bf16.xpose.msra.mxu0 0
    %350 = vmatprep.mubr.bf16.mxu0 0
    %351 = vmatmul.mubr.bf16.gmra.mxu0 %v313
    %v352 = vpop.f32.mrf.mxu0
    %v353 = vadd.f32 0.0, %v352
    %v354 = vpop.f32.mrf.mxu0
    %v355 = vpop.f32.mrf.mxu0
    %v356 = vpop.f32.mrf.mxu0
    %357 = vdwg.mxu0
    %v359 = vsel %vm81, %v63, 0
    %v362 = vsel %vm81, %v71, 0
    %364 = vmatprep.subr.bf16.mxu0 0
    %365 = vmatpush1.bf16.xpose.msra.mxu0 0
    %366 = vmatprep.subr.bf16.mxu0 0
    %367 = vmatpush1.bf16.xpose.msra.mxu0 0
    %368 = vmatprep.subr.bf16.mxu0 0
    %369 = vmatpush1.bf16.xpose.msra.mxu0 0
    %370 = vmatprep.subr.bf16.mxu0 0
    %371 = vmatpush1.bf16.xpose.msra.mxu0 0
    %372 = vmatprep.subr.bf16.mxu0 0
    %373 = vmatpush1.bf16.xpose.msra.mxu0 0
    %374 = vmatprep.subr.bf16.mxu0 0
    %375 = vmatpush1.bf16.xpose.msra.mxu0 0
    %376 = vmatprep.subr.bf16.mxu0 0
    %377 = vmatpush1.bf16.xpose.msra.mxu0 0
    %378 = vmatprep.subr.bf16.mxu0 0
    %379 = vmatpush1.bf16.xpose.msra.mxu0 %v362
    %380 = vmatprep.subr.bf16.mxu0 0
    %381 = vmatpush2.bf16.xpose.msra.mxu0 0
    %382 = vmatprep.subr.bf16.mxu0 0
    %383 = vmatpush2.bf16.xpose.msra.mxu0 0
    %384 = vmatprep.subr.bf16.mxu0 0
    %385 = vmatpush2.bf16.xpose.msra.mxu0 0
    %386 = vmatprep.subr.bf16.mxu0 0
    %387 = vmatpush2.bf16.xpose.msra.mxu0 0
    %388 = vmatprep.subr.bf16.mxu0 0
    %389 = vmatpush2.bf16.xpose.msra.mxu0 0
    %390 = vmatprep.subr.bf16.mxu0 0
    %391 = vmatpush2.bf16.xpose.msra.mxu0 0
    %392 = vmatprep.subr.bf16.mxu0 0
    %393 = vmatpush2.bf16.xpose.msra.mxu0 0
    %394 = vmatprep.subr.bf16.mxu0 0
    %395 = vmatpush2.bf16.xpose.msra.mxu0 0
    %396 = vmatprep.mubr.bf16.mxu0 0
    %397 = vmatmul.mubr.bf16.gmra.mxu0 %v359
    %v398 = vpop.f32.mrf.mxu0
    %v399 = vadd.f32 0.0, %v398
    %v400 = vpop.f32.mrf.mxu0
    %v401 = vpop.f32.mrf.mxu0
    %v402 = vpop.f32.mrf.mxu0
    %403 = vdwg.mxu0
    %v405 = vsel %vm81, %v64, 0
    %v408 = vsel %vm81, %v72, 0
    %410 = vmatprep.subr.bf16.mxu0 0
    %411 = vmatpush1.bf16.xpose.msra.mxu0 0
    %412 = vmatprep.subr.bf16.mxu0 0
    %413 = vmatpush1.bf16.xpose.msra.mxu0 0
    %414 = vmatprep.subr.bf16.mxu0 0
    %415 = vmatpush1.bf16.xpose.msra.mxu0 0
    %416 = vmatprep.subr.bf16.mxu0 0
    %417 = vmatpush1.bf16.xpose.msra.mxu0 0
    %418 = vmatprep.subr.bf16.mxu0 0
    %419 = vmatpush1.bf16.xpose.msra.mxu0 0
    %420 = vmatprep.subr.bf16.mxu0 0
    %421 = vmatpush1.bf16.xpose.msra.mxu0 0
    %422 = vmatprep.subr.bf16.mxu0 0
    %423 = vmatpush1.bf16.xpose.msra.mxu0 0
    %424 = vmatprep.subr.bf16.mxu0 0
    %425 = vmatpush1.bf16.xpose.msra.mxu0 %v408
    %426 = vmatprep.subr.bf16.mxu0 0
    %427 = vmatpush2.bf16.xpose.msra.mxu0 0
    %428 = vmatprep.subr.bf16.mxu0 0
    %429 = vmatpush2.bf16.xpose.msra.mxu0 0
    %430 = vmatprep.subr.bf16.mxu0 0
    %431 = vmatpush2.bf16.xpose.msra.mxu0 0
    %432 = vmatprep.subr.bf16.mxu0 0
    %433 = vmatpush2.bf16.xpose.msra.mxu0 0
    %434 = vmatprep.subr.bf16.mxu0 0
    %435 = vmatpush2.bf16.xpose.msra.mxu0 0
    %436 = vmatprep.subr.bf16.mxu0 0
    %437 = vmatpush2.bf16.xpose.msra.mxu0 0
    %438 = vmatprep.subr.bf16.mxu0 0
    %439 = vmatpush2.bf16.xpose.msra.mxu0 0
    %440 = vmatprep.subr.bf16.mxu0 0
    %441 = vmatpush2.bf16.xpose.msra.mxu0 0
    %442 = vmatprep.mubr.bf16.mxu0 0
    %443 = vmatmul.mubr.bf16.gmra.mxu0 %v405
    %v444 = vpop.f32.mrf.mxu0
    %v445 = vadd.f32 0.0, %v444
    %v446 = vpop.f32.mrf.mxu0
    %v447 = vpop.f32.mrf.mxu0
    %v448 = vpop.f32.mrf.mxu0
    %449 = vdwg.mxu0
    %v450 = vmul.f32 %v123, 0.17677669
    %v451 = vmul.f32 %v169, 0.17677669
    %v452 = vmul.f32 %v215, 0.17677669
    %v453 = vmul.f32 %v261, 0.17677669
    %v454 = vmul.f32 %v307, 0.17677669
    %v455 = vmul.f32 %v353, 0.17677669
    %v456 = vmul.f32 %v399, 0.17677669
    %v457 = vmul.f32 %v445, 0.17677669
    %vm458 = vcmask 64512
    %v459 = vsel %vm458, %v450, -inf
    %460 = vmax.xlane.f32.xlu0 %v459
    %v461 = vpop.xlane.xlu0 %460
    %v462 = vsel %vm458, %v451, -inf
    %463 = vmax.xlane.f32.xlu0 %v462
    %v464 = vpop.xlane.xlu0 %463
    %v465 = vsel %vm458, %v452, -inf
    %466 = vmax.xlane.f32.xlu0 %v465
    %v467 = vpop.xlane.xlu0 %466
    %v468 = vsel %vm458, %v453, -inf
    %469 = vmax.xlane.f32.xlu0 %v468
    %v470 = vpop.xlane.xlu0 %469
    %v471 = vsel %vm458, %v454, -inf
    %472 = vmax.xlane.f32.xlu0 %v471
    %v473 = vpop.xlane.xlu0 %472
    %v474 = vsel %vm458, %v455, -inf
    %475 = vmax.xlane.f32.xlu0 %v474
    %v476 = vpop.xlane.xlu0 %475
    %v477 = vsel %vm458, %v456, -inf
    %478 = vmax.xlane.f32.xlu0 %v477
    %v479 = vpop.xlane.xlu0 %478
    %v480 = vsel %vm458, %v457, -inf
    %481 = vmax.xlane.f32.xlu0 %v480
    %v482 = vpop.xlane.xlu0 %481
    %v483 = vsub.f32 %v450, %v461
    %v484 = vsub.f32 %v451, %v464
    %v485 = vsub.f32 %v452, %v467
    %v486 = vsub.f32 %v453, %v470
    %v487 = vsub.f32 %v454, %v473
    %v488 = vsub.f32 %v455, %v476
    %v489 = vsub.f32 %v456, %v479
    %v490 = vsub.f32 %v457, %v482
    %v491 = vpack.c.bf16 %v483, %v483
    %v492 = vpack.c.bf16 %v484, %v484
    %v493 = vpack.c.bf16 %v485, %v485
    %v494 = vpack.c.bf16 %v486, %v486
    %v495 = vpack.c.bf16 %v487, %v487
    %v496 = vpack.c.bf16 %v488, %v488
    %v497 = vpack.c.bf16 %v489, %v489
    %v498 = vpack.c.bf16 %v490, %v490
    %v500 = vmul.bf16 %v491, 1069105081
    %v501 = vpow.bf16.pop %v500
    %v503 = vmul.bf16 %v492, 1069105081
    %v504 = vpow.bf16.pop %v503
    %v506 = vmul.bf16 %v493, 1069105081
    %v507 = vpow.bf16.pop %v506
    %v509 = vmul.bf16 %v494, 1069105081
    %v510 = vpow.bf16.pop %v509
    %v512 = vmul.bf16 %v495, 1069105081
    %v513 = vpow.bf16.pop %v512
    %v515 = vmul.bf16 %v496, 1069105081
    %v516 = vpow.bf16.pop %v515
    %v518 = vmul.bf16 %v497, 1069105081
    %v519 = vpow.bf16.pop %v518
    %v521 = vmul.bf16 %v498, 1069105081
    %v522 = vpow.bf16.pop %v521
    %v523 = vunpack.c.l.bf16 %v501
    %v524 = vunpack.c.l.bf16 %v504
    %v525 = vunpack.c.l.bf16 %v507
    %v526 = vunpack.c.l.bf16 %v510
    %v527 = vunpack.c.l.bf16 %v513
    %v528 = vunpack.c.l.bf16 %v516
    %v529 = vunpack.c.l.bf16 %v519
    %v530 = vunpack.c.l.bf16 %v522
    %v531 = vsel %vm458, %v523, 0.0
    %532 = vadd.xlane.f32.xlu0 %v531
    %v533 = vpop.xlane.xlu0 %532
    %v534 = vsel %vm458, %v524, 0.0
    %535 = vadd.xlane.f32.xlu0 %v534
    %v536 = vpop.xlane.xlu0 %535
    %v537 = vsel %vm458, %v525, 0.0
    %538 = vadd.xlane.f32.xlu0 %v537
    %v539 = vpop.xlane.xlu0 %538
    %v540 = vsel %vm458, %v526, 0.0
    %541 = vadd.xlane.f32.xlu0 %v540
    %v542 = vpop.xlane.xlu0 %541
    %v543 = vsel %vm458, %v527, 0.0
    %544 = vadd.xlane.f32.xlu0 %v543
    %v545 = vpop.xlane.xlu0 %544
    %v546 = vsel %vm458, %v528, 0.0
    %547 = vadd.xlane.f32.xlu0 %v546
    %v548 = vpop.xlane.xlu0 %547
    %v549 = vsel %vm458, %v529, 0.0
    %550 = vadd.xlane.f32.xlu0 %v549
    %v551 = vpop.xlane.xlu0 %550
    %v552 = vsel %vm458, %v530, 0.0
    %553 = vadd.xlane.f32.xlu0 %v552
    %v554 = vpop.xlane.xlu0 %553
    %v556 = vsel %vm458, %v501, 0
    %vm558 = vcmask 1043456
    %v560 = vsel %vm558, %v73, 0
    %562 = vmatprep.subr.bf16.mxu0 0
    %563 = vmatpush1.bf16.msra.mxu0 0
    %564 = vmatprep.subr.bf16.mxu0 0
    %565 = vmatpush1.bf16.msra.mxu0 0
    %566 = vmatprep.subr.bf16.mxu0 0
    %567 = vmatpush1.bf16.msra.mxu0 0
    %568 = vmatprep.subr.bf16.mxu0 0
    %569 = vmatpush1.bf16.msra.mxu0 0
    %570 = vmatprep.subr.bf16.mxu0 0
    %571 = vmatpush1.bf16.msra.mxu0 0
    %572 = vmatprep.subr.bf16.mxu0 0
    %573 = vmatpush1.bf16.msra.mxu0 0
    %574 = vmatprep.subr.bf16.mxu0 0
    %575 = vmatpush1.bf16.msra.mxu0 0
    %576 = vmatprep.subr.bf16.mxu0 0
    %577 = vmatpush1.bf16.msra.mxu0 %v560
    %578 = vmatprep.subr.bf16.mxu0 0
    %579 = vmatpush2.bf16.msra.mxu0 0
    %580 = vmatprep.subr.bf16.mxu0 0
    %581 = vmatpush2.bf16.msra.mxu0 0
    %582 = vmatprep.subr.bf16.mxu0 0
    %583 = vmatpush2.bf16.msra.mxu0 0
    %584 = vmatprep.subr.bf16.mxu0 0
    %585 = vmatpush2.bf16.msra.mxu0 0
    %586 = vmatprep.subr.bf16.mxu0 0
    %587 = vmatpush2.bf16.msra.mxu0 0
    %588 = vmatprep.subr.bf16.mxu0 0
    %589 = vmatpush2.bf16.msra.mxu0 0
    %590 = vmatprep.subr.bf16.mxu0 0
    %591 = vmatpush2.bf16.msra.mxu0 0
    %592 = vmatprep.subr.bf16.mxu0 0
    %593 = vmatpush2.bf16.msra.mxu0 0
    %594 = vmatprep.mubr.bf16.mxu0 0
    %595 = vmatmul.mubr.bf16.gmra.mxu0 %v556
    %v596 = vpop.f32.mrf.mxu0
    %v597 = vadd.f32 0.0, %v596
    %v598 = vpop.f32.mrf.mxu0
    %v599 = vpop.f32.mrf.mxu0
    %v600 = vpop.f32.mrf.mxu0
    %601 = vdwg.mxu0
    %v603 = vsel %vm458, %v504, 0
    %v606 = vsel %vm558, %v74, 0
    %608 = vmatprep.subr.bf16.mxu0 0
    %609 = vmatpush1.bf16.msra.mxu0 0
    %610 = vmatprep.subr.bf16.mxu0 0
    %611 = vmatpush1.bf16.msra.mxu0 0
    %612 = vmatprep.subr.bf16.mxu0 0
    %613 = vmatpush1.bf16.msra.mxu0 0
    %614 = vmatprep.subr.bf16.mxu0 0
    %615 = vmatpush1.bf16.msra.mxu0 0
    %616 = vmatprep.subr.bf16.mxu0 0
    %617 = vmatpush1.bf16.msra.mxu0 0
    %618 = vmatprep.subr.bf16.mxu0 0
    %619 = vmatpush1.bf16.msra.mxu0 0
    %620 = vmatprep.subr.bf16.mxu0 0
    %621 = vmatpush1.bf16.msra.mxu0 0
    %622 = vmatprep.subr.bf16.mxu0 0
    %623 = vmatpush1.bf16.msra.mxu0 %v606
    %624 = vmatprep.subr.bf16.mxu0 0
    %625 = vmatpush2.bf16.msra.mxu0 0
    %626 = vmatprep.subr.bf16.mxu0 0
    %627 = vmatpush2.bf16.msra.mxu0 0
    %628 = vmatprep.subr.bf16.mxu0 0
    %629 = vmatpush2.bf16.msra.mxu0 0
    %630 = vmatprep.subr.bf16.mxu0 0
    %631 = vmatpush2.bf16.msra.mxu0 0
    %632 = vmatprep.subr.bf16.mxu0 0
    %633 = vmatpush2.bf16.msra.mxu0 0
    %634 = vmatprep.subr.bf16.mxu0 0
    %635 = vmatpush2.bf16.msra.mxu0 0
    %636 = vmatprep.subr.bf16.mxu0 0
    %637 = vmatpush2.bf16.msra.mxu0 0
    %638 = vmatprep.subr.bf16.mxu0 0
    %639 = vmatpush2.bf16.msra.mxu0 0
    %640 = vmatprep.mubr.bf16.mxu0 0
    %641 = vmatmul.mubr.bf16.gmra.mxu0 %v603
    %v642 = vpop.f32.mrf.mxu0
    %v643 = vadd.f32 0.0, %v642
    %v644 = vpop.f32.mrf.mxu0
    %v645 = vpop.f32.mrf.mxu0
    %v646 = vpop.f32.mrf.mxu0
    %647 = vdwg.mxu0
    %v649 = vsel %vm458, %v507, 0
    %v652 = vsel %vm558, %v75, 0
    %654 = vmatprep.subr.bf16.mxu0 0
    %655 = vmatpush1.bf16.msra.mxu0 0
    %656 = vmatprep.subr.bf16.mxu0 0
    %657 = vmatpush1.bf16.msra.mxu0 0
    %658 = vmatprep.subr.bf16.mxu0 0
    %659 = vmatpush1.bf16.msra.mxu0 0
    %660 = vmatprep.subr.bf16.mxu0 0
    %661 = vmatpush1.bf16.msra.mxu0 0
    %662 = vmatprep.subr.bf16.mxu0 0
    %663 = vmatpush1.bf16.msra.mxu0 0
    %664 = vmatprep.subr.bf16.mxu0 0
    %665 = vmatpush1.bf16.msra.mxu0 0
    %666 = vmatprep.subr.bf16.mxu0 0
    %667 = vmatpush1.bf16.msra.mxu0 0
    %668 = vmatprep.subr.bf16.mxu0 0
    %669 = vmatpush1.bf16.msra.mxu0 %v652
    %670 = vmatprep.subr.bf16.mxu0 0
    %671 = vmatpush2.bf16.msra.mxu0 0
    %672 = vmatprep.subr.bf16.mxu0 0
    %673 = vmatpush2.bf16.msra.mxu0 0
    %674 = vmatprep.subr.bf16.mxu0 0
    %675 = vmatpush2.bf16.msra.mxu0 0
    %676 = vmatprep.subr.bf16.mxu0 0
    %677 = vmatpush2.bf16.msra.mxu0 0
    %678 = vmatprep.subr.bf16.mxu0 0
    %679 = vmatpush2.bf16.msra.mxu0 0
    %680 = vmatprep.subr.bf16.mxu0 0
    %681 = vmatpush2.bf16.msra.mxu0 0
    %682 = vmatprep.subr.bf16.mxu0 0
    %683 = vmatpush2.bf16.msra.mxu0 0
    %684 = vmatprep.subr.bf16.mxu0 0
    %685 = vmatpush2.bf16.msra.mxu0 0
    %686 = vmatprep.mubr.bf16.mxu0 0
    %687 = vmatmul.mubr.bf16.gmra.mxu0 %v649
    %v688 = vpop.f32.mrf.mxu0
    %v689 = vadd.f32 0.0, %v688
    %v690 = vpop.f32.mrf.mxu0
    %v691 = vpop.f32.mrf.mxu0
    %v692 = vpop.f32.mrf.mxu0
    %693 = vdwg.mxu0
    %v695 = vsel %vm458, %v510, 0
    %v698 = vsel %vm558, %v76, 0
    %700 = vmatprep.subr.bf16.mxu0 0
    %701 = vmatpush1.bf16.msra.mxu0 0
    %702 = vmatprep.subr.bf16.mxu0 0
    %703 = vmatpush1.bf16.msra.mxu0 0
    %704 = vmatprep.subr.bf16.mxu0 0
    %705 = vmatpush1.bf16.msra.mxu0 0
    %706 = vmatprep.subr.bf16.mxu0 0
    %707 = vmatpush1.bf16.msra.mxu0 0
    %708 = vmatprep.subr.bf16.mxu0 0
    %709 = vmatpush1.bf16.msra.mxu0 0
    %710 = vmatprep.subr.bf16.mxu0 0
    %711 = vmatpush1.bf16.msra.mxu0 0
    %712 = vmatprep.subr.bf16.mxu0 0
    %713 = vmatpush1.bf16.msra.mxu0 0
    %714 = vmatprep.subr.bf16.mxu0 0
    %715 = vmatpush1.bf16.msra.mxu0 %v698
    %716 = vmatprep.subr.bf16.mxu0 0
    %717 = vmatpush2.bf16.msra.mxu0 0
    %718 = vmatprep.subr.bf16.mxu0 0
    %719 = vmatpush2.bf16.msra.mxu0 0
    %720 = vmatprep.subr.bf16.mxu0 0
    %721 = vmatpush2.bf16.msra.mxu0 0
    %722 = vmatprep.subr.bf16.mxu0 0
    %723 = vmatpush2.bf16.msra.mxu0 0
    %724 = vmatprep.subr.bf16.mxu0 0
    %725 = vmatpush2.bf16.msra.mxu0 0
    %726 = vmatprep.subr.bf16.mxu0 0
    %727 = vmatpush2.bf16.msra.mxu0 0
    %728 = vmatprep.subr.bf16.mxu0 0
    %729 = vmatpush2.bf16.msra.mxu0 0
    %730 = vmatprep.subr.bf16.mxu0 0
    %731 = vmatpush2.bf16.msra.mxu0 0
    %732 = vmatprep.mubr.bf16.mxu0 0
    %733 = vmatmul.mubr.bf16.gmra.mxu0 %v695
    %v734 = vpop.f32.mrf.mxu0
    %v735 = vadd.f32 0.0, %v734
    %v736 = vpop.f32.mrf.mxu0
    %v737 = vpop.f32.mrf.mxu0
    %v738 = vpop.f32.mrf.mxu0
    %739 = vdwg.mxu0
    %v741 = vsel %vm458, %v513, 0
    %v744 = vsel %vm558, %v77, 0
    %746 = vmatprep.subr.bf16.mxu0 0
    %747 = vmatpush1.bf16.msra.mxu0 0
    %748 = vmatprep.subr.bf16.mxu0 0
    %749 = vmatpush1.bf16.msra.mxu0 0
    %750 = vmatprep.subr.bf16.mxu0 0
    %751 = vmatpush1.bf16.msra.mxu0 0
    %752 = vmatprep.subr.bf16.mxu0 0
    %753 = vmatpush1.bf16.msra.mxu0 0
    %754 = vmatprep.subr.bf16.mxu0 0
    %755 = vmatpush1.bf16.msra.mxu0 0
    %756 = vmatprep.subr.bf16.mxu0 0
    %757 = vmatpush1.bf16.msra.mxu0 0
    %758 = vmatprep.subr.bf16.mxu0 0
    %759 = vmatpush1.bf16.msra.mxu0 0
    %760 = vmatprep.subr.bf16.mxu0 0
    %761 = vmatpush1.bf16.msra.mxu0 %v744
    %762 = vmatprep.subr.bf16.mxu0 0
    %763 = vmatpush2.bf16.msra.mxu0 0
    %764 = vmatprep.subr.bf16.mxu0 0
    %765 = vmatpush2.bf16.msra.mxu0 0
    %766 = vmatprep.subr.bf16.mxu0 0
    %767 = vmatpush2.bf16.msra.mxu0 0
    %768 = vmatprep.subr.bf16.mxu0 0
    %769 = vmatpush2.bf16.msra.mxu0 0
    %770 = vmatprep.subr.bf16.mxu0 0
    %771 = vmatpush2.bf16.msra.mxu0 0
    %772 = vmatprep.subr.bf16.mxu0 0
    %773 = vmatpush2.bf16.msra.mxu0 0
    %774 = vmatprep.subr.bf16.mxu0 0
    %775 = vmatpush2.bf16.msra.mxu0 0
    %776 = vmatprep.subr.bf16.mxu0 0
    %777 = vmatpush2.bf16.msra.mxu0 0
    %778 = vmatprep.mubr.bf16.mxu0 0
    %779 = vmatmul.mubr.bf16.gmra.mxu0 %v741
    %v780 = vpop.f32.mrf.mxu0
    %v781 = vadd.f32 0.0, %v780
    %v782 = vpop.f32.mrf.mxu0
    %v783 = vpop.f32.mrf.mxu0
    %v784 = vpop.f32.mrf.mxu0
    %785 = vdwg.mxu0
    %v787 = vsel %vm458, %v516, 0
    %v790 = vsel %vm558, %v78, 0
    %792 = vmatprep.subr.bf16.mxu0 0
    %793 = vmatpush1.bf16.msra.mxu0 0
    %794 = vmatprep.subr.bf16.mxu0 0
    %795 = vmatpush1.bf16.msra.mxu0 0
    %796 = vmatprep.subr.bf16.mxu0 0
    %797 = vmatpush1.bf16.msra.mxu0 0
    %798 = vmatprep.subr.bf16.mxu0 0
    %799 = vmatpush1.bf16.msra.mxu0 0
    %800 = vmatprep.subr.bf16.mxu0 0
    %801 = vmatpush1.bf16.msra.mxu0 0
    %802 = vmatprep.subr.bf16.mxu0 0
    %803 = vmatpush1.bf16.msra.mxu0 0
    %804 = vmatprep.subr.bf16.mxu0 0
    %805 = vmatpush1.bf16.msra.mxu0 0
    %806 = vmatprep.subr.bf16.mxu0 0
    %807 = vmatpush1.bf16.msra.mxu0 %v790
    %808 = vmatprep.subr.bf16.mxu0 0
    %809 = vmatpush2.bf16.msra.mxu0 0
    %810 = vmatprep.subr.bf16.mxu0 0
    %811 = vmatpush2.bf16.msra.mxu0 0
    %812 = vmatprep.subr.bf16.mxu0 0
    %813 = vmatpush2.bf16.msra.mxu0 0
    %814 = vmatprep.subr.bf16.mxu0 0
    %815 = vmatpush2.bf16.msra.mxu0 0
    %816 = vmatprep.subr.bf16.mxu0 0
    %817 = vmatpush2.bf16.msra.mxu0 0
    %818 = vmatprep.subr.bf16.mxu0 0
    %819 = vmatpush2.bf16.msra.mxu0 0
    %820 = vmatprep.subr.bf16.mxu0 0
    %821 = vmatpush2.bf16.msra.mxu0 0
    %822 = vmatprep.subr.bf16.mxu0 0
    %823 = vmatpush2.bf16.msra.mxu0 0
    %824 = vmatprep.mubr.bf16.mxu0 0
    %825 = vmatmul.mubr.bf16.gmra.mxu0 %v787
    %v826 = vpop.f32.mrf.mxu0
    %v827 = vadd.f32 0.0, %v826
    %v828 = vpop.f32.mrf.mxu0
    %v829 = vpop.f32.mrf.mxu0
    %v830 = vpop.f32.mrf.mxu0
    %831 = vdwg.mxu0
    %v833 = vsel %vm458, %v519, 0
    %v836 = vsel %vm558, %v79, 0
    %838 = vmatprep.subr.bf16.mxu0 0
    %839 = vmatpush1.bf16.msra.mxu0 0
    %840 = vmatprep.subr.bf16.mxu0 0
    %841 = vmatpush1.bf16.msra.mxu0 0
    %842 = vmatprep.subr.bf16.mxu0 0
    %843 = vmatpush1.bf16.msra.mxu0 0
    %844 = vmatprep.subr.bf16.mxu0 0
    %845 = vmatpush1.bf16.msra.mxu0 0
    %846 = vmatprep.subr.bf16.mxu0 0
    %847 = vmatpush1.bf16.msra.mxu0 0
    %848 = vmatprep.subr.bf16.mxu0 0
    %849 = vmatpush1.bf16.msra.mxu0 0
    %850 = vmatprep.subr.bf16.mxu0 0
    %851 = vmatpush1.bf16.msra.mxu0 0
    %852 = vmatprep.subr.bf16.mxu0 0
    %853 = vmatpush1.bf16.msra.mxu0 %v836
    %854 = vmatprep.subr.bf16.mxu0 0
    %855 = vmatpush2.bf16.msra.mxu0 0
    %856 = vmatprep.subr.bf16.mxu0 0
    %857 = vmatpush2.bf16.msra.mxu0 0
    %858 = vmatprep.subr.bf16.mxu0 0
    %859 = vmatpush2.bf16.msra.mxu0 0
    %860 = vmatprep.subr.bf16.mxu0 0
    %861 = vmatpush2.bf16.msra.mxu0 0
    %862 = vmatprep.subr.bf16.mxu0 0
    %863 = vmatpush2.bf16.msra.mxu0 0
    %864 = vmatprep.subr.bf16.mxu0 0
    %865 = vmatpush2.bf16.msra.mxu0 0
    %866 = vmatprep.subr.bf16.mxu0 0
    %867 = vmatpush2.bf16.msra.mxu0 0
    %868 = vmatprep.subr.bf16.mxu0 0
    %869 = vmatpush2.bf16.msra.mxu0 0
    %870 = vmatprep.mubr.bf16.mxu0 0
    %871 = vmatmul.mubr.bf16.gmra.mxu0 %v833
    %v872 = vpop.f32.mrf.mxu0
    %v873 = vadd.f32 0.0, %v872
    %v874 = vpop.f32.mrf.mxu0
    %v875 = vpop.f32.mrf.mxu0
    %v876 = vpop.f32.mrf.mxu0
    %877 = vdwg.mxu0
    %v879 = vsel %vm458, %v522, 0
    %v882 = vsel %vm558, %v80, 0
    %884 = vmatprep.subr.bf16.mxu0 0
    %885 = vmatpush1.bf16.msra.mxu0 0
    %886 = vmatprep.subr.bf16.mxu0 0
    %887 = vmatpush1.bf16.msra.mxu0 0
    %888 = vmatprep.subr.bf16.mxu0 0
    %889 = vmatpush1.bf16.msra.mxu0 0
    %890 = vmatprep.subr.bf16.mxu0 0
    %891 = vmatpush1.bf16.msra.mxu0 0
    %892 = vmatprep.subr.bf16.mxu0 0
    %893 = vmatpush1.bf16.msra.mxu0 0
    %894 = vmatprep.subr.bf16.mxu0 0
    %895 = vmatpush1.bf16.msra.mxu0 0
    %896 = vmatprep.subr.bf16.mxu0 0
    %897 = vmatpush1.bf16.msra.mxu0 0
    %898 = vmatprep.subr.bf16.mxu0 0
    %899 = vmatpush1.bf16.msra.mxu0 %v882
    %900 = vmatprep.subr.bf16.mxu0 0
    %901 = vmatpush2.bf16.msra.mxu0 0
    %902 = vmatprep.subr.bf16.mxu0 0
    %903 = vmatpush2.bf16.msra.mxu0 0
    %904 = vmatprep.subr.bf16.mxu0 0
    %905 = vmatpush2.bf16.msra.mxu0 0
    %906 = vmatprep.subr.bf16.mxu0 0
    %907 = vmatpush2.bf16.msra.mxu0 0
    %908 = vmatprep.subr.bf16.mxu0 0
    %909 = vmatpush2.bf16.msra.mxu0 0
    %910 = vmatprep.subr.bf16.mxu0 0
    %911 = vmatpush2.bf16.msra.mxu0 0
    %912 = vmatprep.subr.bf16.mxu0 0
    %913 = vmatpush2.bf16.msra.mxu0 0
    %914 = vmatprep.subr.bf16.mxu0 0
    %915 = vmatpush2.bf16.msra.mxu0 0
    %916 = vmatprep.mubr.bf16.mxu0 0
    %917 = vmatmul.mubr.bf16.gmra.mxu0 %v879
    %v918 = vpop.f32.mrf.mxu0
    %v919 = vadd.f32 0.0, %v918
    %v920 = vpop.f32.mrf.mxu0
    %v921 = vpop.f32.mrf.mxu0
    %v922 = vpop.f32.mrf.mxu0
    %923 = vdwg.mxu0
    %v924 = vrcp.pop %v533
    %v925 = vrcp.pop %v536
    %v926 = vrcp.pop %v539
    %v927 = vrcp.pop %v542
    %v928 = vrcp.pop %v545
    %v929 = vrcp.pop %v548
    %v930 = vrcp.pop %v551
    %v931 = vrcp.pop %v554
    %v932 = vmul.f32 %v597, %v924
    %v933 = vmul.f32 %v643, %v925
    %v934 = vmul.f32 %v689, %v926
    %v935 = vmul.f32 %v735, %v927
    %v936 = vmul.f32 %v781, %v928
    %v937 = vmul.f32 %v827, %v929
    %v938 = vmul.f32 %v873, %v930
    %v939 = vmul.f32 %v919, %v931
    %v940 = vcombine.low %v932, %v934
    %v941 = vcombine.high %v932, %v934
    %v943 = vunpack.c.l.s4 1983009808
    %v944 = vunpack.c.0.s8 %v943
    %v945 = vlaneseq
    %v946 = vshrl.u32 %v945, 7
    %v947 = vsub.s32 %v944, %v946
    %v948 = vrot.slane %v940, %v947
    %v950 = vunpack.c.l.s4 1983009808
    %v951 = vunpack.c.0.s8 %v950
    %v952 = vlaneseq
    %v953 = vshrl.u32 %v952, 7
    %v954 = vsub.s32 %v951, %v953
    %v955 = vrot.slane %v941, %v954
    %v956 = vcombine.low %v933, %v935
    %v957 = vcombine.high %v933, %v935
    %v959 = vunpack.c.l.s4 1983009808
    %v960 = vunpack.c.0.s8 %v959
    %v961 = vlaneseq
    %v962 = vshrl.u32 %v961, 7
    %v963 = vsub.s32 %v960, %v962
    %v964 = vrot.slane %v956, %v963
    %v966 = vunpack.c.l.s4 1983009808
    %v967 = vunpack.c.0.s8 %v966
    %v968 = vlaneseq
    %v969 = vshrl.u32 %v968, 7
    %v970 = vsub.s32 %v967, %v969
    %v971 = vrot.slane %v957, %v970
    %v972 = vcombine.low %v936, %v938
    %v973 = vcombine.high %v936, %v938
    %v975 = vunpack.c.l.s4 1983009808
    %v976 = vunpack.c.0.s8 %v975
    %v977 = vlaneseq
    %v978 = vshrl.u32 %v977, 7
    %v979 = vsub.s32 %v976, %v978
    %v980 = vrot.slane %v972, %v979
    %v982 = vunpack.c.l.s4 1983009808
    %v983 = vunpack.c.0.s8 %v982
    %v984 = vlaneseq
    %v985 = vshrl.u32 %v984, 7
    %v986 = vsub.s32 %v983, %v985
    %v987 = vrot.slane %v973, %v986
    %v988 = vcombine.low %v937, %v939
    %v989 = vcombine.high %v937, %v939
    %v991 = vunpack.c.l.s4 1983009808
    %v992 = vunpack.c.0.s8 %v991
    %v993 = vlaneseq
    %v994 = vshrl.u32 %v993, 7
    %v995 = vsub.s32 %v992, %v994
    %v996 = vrot.slane %v988, %v995
    %v998 = vunpack.c.l.s4 1983009808
    %v999 = vunpack.c.0.s8 %v998
    %v1000 = vlaneseq
    %v1001 = vshrl.u32 %v1000, 7
    %v1002 = vsub.s32 %v999, %v1001
    %v1003 = vrot.slane %v989, %v1002
    %v1004 = vcombine.low %v948, %v964
    %v1005 = vcombine.high %v948, %v964
    %v1007 = vunpack.c.l.s4 1934713408
    %v1008 = vunpack.c.0.s8 %v1007
    %v1009 = vlaneseq
    %v1010 = vshrl.u32 %v1009, 7
    %v1011 = vsub.s32 %v1008, %v1010
    %v1012 = vrot.slane %v1004, %v1011
    %v1014 = vunpack.c.l.s4 1934713408
    %v1015 = vunpack.c.0.s8 %v1014
    %v1016 = vlaneseq
    %v1017 = vshrl.u32 %v1016, 7
    %v1018 = vsub.s32 %v1015, %v1017
    %v1019 = vrot.slane %v1005, %v1018
    %v1020 = vcombine.low %v955, %v971
    %v1021 = vcombine.high %v955, %v971
    %v1023 = vunpack.c.l.s4 1934713408
    %v1024 = vunpack.c.0.s8 %v1023
    %v1025 = vlaneseq
    %v1026 = vshrl.u32 %v1025, 7
    %v1027 = vsub.s32 %v1024, %v1026
    %v1028 = vrot.slane %v1020, %v1027
    %v1030 = vunpack.c.l.s4 1934713408
    %v1031 = vunpack.c.0.s8 %v1030
    %v1032 = vlaneseq
    %v1033 = vshrl.u32 %v1032, 7
    %v1034 = vsub.s32 %v1031, %v1033
    %v1035 = vrot.slane %v1021, %v1034
    %v1036 = vcombine.low %v980, %v996
    %v1037 = vcombine.high %v980, %v996
    %v1039 = vunpack.c.l.s4 1934713408
    %v1040 = vunpack.c.0.s8 %v1039
    %v1041 = vlaneseq
    %v1042 = vshrl.u32 %v1041, 7
    %v1043 = vsub.s32 %v1040, %v1042
    %v1044 = vrot.slane %v1036, %v1043
    %v1046 = vunpack.c.l.s4 1934713408
    %v1047 = vunpack.c.0.s8 %v1046
    %v1048 = vlaneseq
    %v1049 = vshrl.u32 %v1048, 7
    %v1050 = vsub.s32 %v1047, %v1049
    %v1051 = vrot.slane %v1037, %v1050
    %v1052 = vcombine.low %v987, %v1003
    %v1053 = vcombine.high %v987, %v1003
    %v1055 = vunpack.c.l.s4 1934713408
    %v1056 = vunpack.c.0.s8 %v1055
    %v1057 = vlaneseq
    %v1058 = vshrl.u32 %v1057, 7
    %v1059 = vsub.s32 %v1056, %v1058
    %v1060 = vrot.slane %v1052, %v1059
    %v1062 = vunpack.c.l.s4 1934713408
    %v1063 = vunpack.c.0.s8 %v1062
    %v1064 = vlaneseq
    %v1065 = vshrl.u32 %v1064, 7
    %v1066 = vsub.s32 %v1063, %v1065
    %v1067 = vrot.slane %v1053, %v1066
    %v1068 = vcombine.low %v1012, %v1044
    %v1069 = vcombine.high %v1012, %v1044
    %v1070 = vcombine.low %v1019, %v1051
    %v1071 = vcombine.high %v1019, %v1051
    %v1072 = vcombine.low %v1028, %v1060
    %v1073 = vcombine.high %v1028, %v1060
    %v1074 = vcombine.low %v1035, %v1067
    %v1075 = vcombine.high %v1035, %v1067
    %v1076 = vcombine.low %v1068, %v1070
    %v1077 = vcombine.high %v1068, %v1070
    %v1079 = vunpack.c.l.s4 1983009808
    %v1080 = vunpack.c.0.s8 %v1079
    %v1081 = vlaneseq
    %v1082 = vshrl.u32 %v1081, 7
    %v1083 = vsub.s32 %v1080, %v1082
    %v1084 = vrot.slane %v1076, %v1083
    %v1086 = vunpack.c.l.s4 1983009808
    %v1087 = vunpack.c.0.s8 %v1086
    %v1088 = vlaneseq
    %v1089 = vshrl.u32 %v1088, 7
    %v1090 = vsub.s32 %v1087, %v1089
    %v1091 = vrot.slane %v1077, %v1090
    %v1092 = vcombine.low %v1069, %v1071
    %v1093 = vcombine.high %v1069, %v1071
    %v1095 = vunpack.c.l.s4 1983009808
    %v1096 = vunpack.c.0.s8 %v1095
    %v1097 = vlaneseq
    %v1098 = vshrl.u32 %v1097, 7
    %v1099 = vsub.s32 %v1096, %v1098
    %v1100 = vrot.slane %v1092, %v1099
    %v1102 = vunpack.c.l.s4 1983009808
    %v1103 = vunpack.c.0.s8 %v1102
    %v1104 = vlaneseq
    %v1105 = vshrl.u32 %v1104, 7
    %v1106 = vsub.s32 %v1103, %v1105
    %v1107 = vrot.slane %v1093, %v1106
    %v1108 = vcombine.low %v1072, %v1074
    %v1109 = vcombine.high %v1072, %v1074
    %v1111 = vunpack.c.l.s4 1983009808
    %v1112 = vunpack.c.0.s8 %v1111
    %v1113 = vlaneseq
    %v1114 = vshrl.u32 %v1113, 7
    %v1115 = vsub.s32 %v1112, %v1114
    %v1116 = vrot.slane %v1108, %v1115
    %v1118 = vunpack.c.l.s4 1983009808
    %v1119 = vunpack.c.0.s8 %v1118
    %v1120 = vlaneseq
    %v1121 = vshrl.u32 %v1120, 7
    %v1122 = vsub.s32 %v1119, %v1121
    %v1123 = vrot.slane %v1109, %v1122
    %v1124 = vcombine.low %v1073, %v1075
    %v1125 = vcombine.high %v1073, %v1075
    %v1127 = vunpack.c.l.s4 1983009808
    %v1128 = vunpack.c.0.s8 %v1127
    %v1129 = vlaneseq
    %v1130 = vshrl.u32 %v1129, 7
    %v1131 = vsub.s32 %v1128, %v1130
    %v1132 = vrot.slane %v1124, %v1131
    %v1134 = vunpack.c.l.s4 1983009808
    %v1135 = vunpack.c.0.s8 %v1134
    %v1136 = vlaneseq
    %v1137 = vshrl.u32 %v1136, 7
    %v1138 = vsub.s32 %v1135, %v1137
    %v1139 = vrot.slane %v1125, %v1138
    %v1140 = vcombine.low %v1084, %v1100
    %v1141 = vcombine.high %v1084, %v1100
    %v1143 = vunpack.c.l.s4 1934713408
    %v1144 = vunpack.c.0.s8 %v1143
    %v1145 = vlaneseq
    %v1146 = vshrl.u32 %v1145, 7
    %v1147 = vsub.s32 %v1144, %v1146
    %v1148 = vrot.slane %v1140, %v1147
    %v1150 = vunpack.c.l.s4 1934713408
    %v1151 = vunpack.c.0.s8 %v1150
    %v1152 = vlaneseq
    %v1153 = vshrl.u32 %v1152, 7
    %v1154 = vsub.s32 %v1151, %v1153
    %v1155 = vrot.slane %v1141, %v1154
    %v1156 = vcombine.low %v1091, %v1107
    %v1157 = vcombine.high %v1091, %v1107
    %v1159 = vunpack.c.l.s4 1934713408
    %v1160 = vunpack.c.0.s8 %v1159
    %v1161 = vlaneseq
    %v1162 = vshrl.u32 %v1161, 7
    %v1163 = vsub.s32 %v1160, %v1162
    %v1164 = vrot.slane %v1156, %v1163
    %v1166 = vunpack.c.l.s4 1934713408
    %v1167 = vunpack.c.0.s8 %v1166
    %v1168 = vlaneseq
    %v1169 = vshrl.u32 %v1168, 7
    %v1170 = vsub.s32 %v1167, %v1169
    %v1171 = vrot.slane %v1157, %v1170
    %v1172 = vcombine.low %v1116, %v1132
    %v1173 = vcombine.high %v1116, %v1132
    %v1175 = vunpack.c.l.s4 1934713408
    %v1176 = vunpack.c.0.s8 %v1175
    %v1177 = vlaneseq
    %v1178 = vshrl.u32 %v1177, 7
    %v1179 = vsub.s32 %v1176, %v1178
    %v1180 = vrot.slane %v1172, %v1179
    %v1182 = vunpack.c.l.s4 1934713408
    %v1183 = vunpack.c.0.s8 %v1182
    %v1184 = vlaneseq
    %v1185 = vshrl.u32 %v1184, 7
    %v1186 = vsub.s32 %v1183, %v1185
    %v1187 = vrot.slane %v1173, %v1186
    %v1188 = vcombine.low %v1123, %v1139
    %v1189 = vcombine.high %v1123, %v1139
    %v1191 = vunpack.c.l.s4 1934713408
    %v1192 = vunpack.c.0.s8 %v1191
    %v1193 = vlaneseq
    %v1194 = vshrl.u32 %v1193, 7
    %v1195 = vsub.s32 %v1192, %v1194
    %v1196 = vrot.slane %v1188, %v1195
    %v1198 = vunpack.c.l.s4 1934713408
    %v1199 = vunpack.c.0.s8 %v1198
    %v1200 = vlaneseq
    %v1201 = vshrl.u32 %v1200, 7
    %v1202 = vsub.s32 %v1199, %v1201
    %v1203 = vrot.slane %v1189, %v1202
    %v1204 = vcombine.low %v1148, %v1180
    %v1205 = vcombine.high %v1148, %v1180
    %v1206 = vcombine.low %v1155, %v1187
    %v1207 = vcombine.high %v1155, %v1187
    %v1208 = vcombine.low %v1164, %v1196
    %v1209 = vcombine.high %v1164, %v1196
    %v1210 = vcombine.low %v1171, %v1203
    %v1211 = vcombine.high %v1171, %v1203
    %1213 = vrot.lane.b32.xlu0 %v1205, 32
    %v1214 = vpop.permute.xlu0 %1213
    %1217 = vrot.lane.b32.xlu0 %v1206, 64
    %v1218 = vpop.permute.xlu0 %1217
    %1221 = vrot.lane.b32.xlu0 %v1207, 96
    %v1222 = vpop.permute.xlu0 %1221
    %1225 = vrot.lane.b32.xlu0 %v1209, 32
    %v1226 = vpop.permute.xlu0 %1225
    %1229 = vrot.lane.b32.xlu0 %v1210, 64
    %v1230 = vpop.permute.xlu0 %1229
    %1233 = vrot.lane.b32.xlu0 %v1211, 96
    %v1234 = vpop.permute.xlu0 %1233
    %v1236 = vsel %vm81, %v1204, %v1214
    %vm1237 = vcmask 523264
    %v1238 = vsel %vm1237, %v1236, %v1218
    %vm1239 = vcmask 785408
    %v1240 = vsel %vm1239, %v1238, %v1222
    %v1241 = vsel %vm81, %v1208, %v1226
    %v1242 = vsel %vm1237, %v1241, %v1230
    %v1243 = vsel %vm1239, %v1242, %v1234
    %1244 = vst [vmem:[#allocation8] sm:$0xff] %v1240
    %1245 = vst [vmem:[#allocation8 + $0x8] sm:$0xff] %v1243
    // Predicated region
    $region26: #{tpu_custom_call.1} parent=1 // pred_check
      _
    $region27: #{tpu_custom_call.1} parent=1 // pred_check_branch
      %1247 = sbr.rel (0) target = $region29
    $region28: #{tpu_custom_call.1} parent=1 // pred_region
      %s1249 = ssub.s32 256, 256
      %1250 = vsyncadd [#allocation4], %s1249
      %s1252 = sshll.u32 [#allocation8], 4
      %s1253 = int_to_ptr.vmem [resolvable:$true] %s1252
      %1255 = dma.vmem_to_hbm [thread:$0]  %s1253, 256, %s3, [#allocation4]
    $region29: #{tpu_custom_call.1} parent=1 // pred_fallthru
      _
    // Predicated region
    $region30: #{tpu_custom_call.1} parent=1 // pred_check
      _
    $region31: #{tpu_custom_call.1} parent=1 // pred_check_branch
      %1257 = sbr.rel (0) target = $region33
    $region32: #{tpu_custom_call.1} parent=1 // pred_region
      %1258 = dma.done [#allocation4], 256
    $region33: #{tpu_custom_call.1} parent=1 // pred_fallthru
      _
    %1259 = vsyncpa [#allocation3], 1
    %1260 = vsyncpa [#allocation6], 1
    %1261 = vsyncpa [#allocation4], 1

// kernel: tpu_custom_call.1
$region0: #{tpu_custom_call.1}
  #allocation0 [shape = 'u32[]', space=smem, size = 0x4, offset = 0x4, fixed_abs, tag = 'smem constant byte address 0x4 - core index']
  #allocation1 [shape = 'u32[144,128]{1,0:T(1,128)}', space=vmem, size = 0x12000, scoped, tag = 'internal scratch']
  %s0 = inlined_call_operand.hbm [shape: bf16[8,8,32], index: 0, kind: input, shape index: {}]
  %s1 = inlined_call_operand.hbm [shape: bf16[8,8,32], index: 1, kind: input, shape index: {}]
  %s2 = inlined_call_operand.hbm [shape: bf16[8,8,32], index: 2, kind: input, shape index: {}]
  %s3 = inlined_call_operand.hbm [shape: f32[8,8,32], index: 3, kind: output, shape index: {}]
  %s4 = sld [smem:[#allocation0]]
  $region34: #{tpu_custom_call.1} parent=0
    _
  %s6 = ssub.s32 1, %s4
  %s7 = scalar_select 0, %s6, %s4
  $region1: #{tpu_custom_call.1} parent=0
    #allocation2 [shape = 'u8[16384]{0}', space=vmem, size = 0x4000, scoped, tag = 'input window, operand 0, single buffered']
    #allocation3 [shape = 's32[1]{0}', space=sflag, size = 0x4, scoped, tag = 'scoped memory for tpu_custom_call.1']
    #allocation4 [shape = 's32[1]{0}', space=sflag, size = 0x4, scoped, tag = 'scoped memory for tpu_custom_call.1']
    #allocation5 [shape = 'u8[16384]{0}', space=vmem, size = 0x4000, scoped, tag = 'input window, operand 1, single buffered']
    #allocation6 [shape = 's32[1]{0}', space=sflag, size = 0x4, scoped, tag = 'scoped memory for tpu_custom_call.1']
    #allocation7 [shape = 'u8[16384]{0}', space=vmem, size = 0x4000, scoped, tag = 'input window, operand 2, single buffered']
    #allocation8 [shape = 'u8[32768]{0}', space=vmem, size = 0x8000, scoped, tag = 'output window, operand 0, single buffered']
    %8 = vsyncpa [#allocation3], 0
    %9 = vsyncpa [#allocation6], 0
    %10 = vsyncpa [#allocation4], 0
    // Predicated region
    $region2: #{tpu_custom_call.1} parent=1 // pred_check
      _
    $region3: #{tpu_custom_call.1} parent=1 // pred_check_branch
      %12 = sbr.rel (0) target = $region5
    $region4: #{tpu_custom_call.1} parent=1 // pred_region
      %s14 = ssub.s32 512, 512
      %15 = vsyncadd [#allocation3], %s14
      %s16 = sshll.u32 [#allocation2], 4
      %s17 = int_to_ptr.vmem [resolvable:$true] %s16
      %22 = dma.hbm_to_vmem [thread:$0]  %s0, 512, %s17, [#allocation3], 64, 64, 4
    $region5: #{tpu_custom_call.1} parent=1 // pred_fallthru
      _
    // Predicated region
    $region6: #{tpu_custom_call.1} parent=1 // pred_check
      _
    $region7: #{tpu_custom_call.1} parent=1 // pred_check_branch
      %24 = sbr.rel (0) target = $region9
    $region8: #{tpu_custom_call.1} parent=1 // pred_region
      %s26 = ssub.s32 512, 512
      %27 = vsyncadd [#allocation6], %s26
      %s28 = sshll.u32 [#allocation5], 4
      %s29 = int_to_ptr.vmem [resolvable:$true] %s28
      %34 = dma.hbm_to_vmem [thread:$0]  %s1, 512, %s29, [#allocation6], 64, 64, 4
    $region9: #{tpu_custom_call.1} parent=1 // pred_fallthru
      _
    // Predicated region
    $region10: #{tpu_custom_call.1} parent=1 // pred_check
      _
    $region11: #{tpu_custom_call.1} parent=1 // pred_check_branch
      %36 = sbr.rel (0) target = $region13
    $region12: #{tpu_custom_call.1} parent=1 // pred_region
      %s38 = ssub.s32 512, 512
      %39 = vsyncadd [#allocation6], %s38
      %s40 = sshll.u32 [#allocation7], 4
      %s41 = int_to_ptr.vmem [resolvable:$true] %s40
      %46 = dma.hbm_to_vmem [thread:$0]  %s2, 512, %s41, [#allocation6], 64, 64, 4
    $region13: #{tpu_custom_call.1} parent=1 // pred_fallthru
      _
    // Predicated region
    $region14: #{tpu_custom_call.1} parent=1 // pred_check
      _
    $region15: #{tpu_custom_call.1} parent=1 // pred_check_branch
      %48 = sbr.rel (0) target = $region17
    $region16: #{tpu_custom_call.1} parent=1 // pred_region
      %49 = dma.done [#allocation3], 512
    $region17: #{tpu_custom_call.1} parent=1 // pred_fallthru
      _
    // Predicated region
    $region18: #{tpu_custom_call.1} parent=1 // pred_check
      _
    $region19: #{tpu_custom_call.1} parent=1 // pred_check_branch
      %51 = sbr.rel (0) target = $region21
    $region20: #{tpu_custom_call.1} parent=1 // pred_region
      %52 = dma.done [#allocation6], 512
    $region21: #{tpu_custom_call.1} parent=1 // pred_fallthru
      _
    // Predicated region
    $region22: #{tpu_custom_call.1} parent=1 // pred_check
      _
    $region23: #{tpu_custom_call.1} parent=1 // pred_check_branch
      %54 = sbr.rel (0) target = $region25
    $region24: #{tpu_custom_call.1} parent=1 // pred_region
      %55 = dma.done [#allocation6], 512
    $region25: #{tpu_custom_call.1} parent=1 // pred_fallthru
      _
    %v57 = vld [vmem:[#allocation2] sm:$0xf]
    %v58 = vld [vmem:[#allocation2 + $0x4] sm:$0xf]
    %v59 = vld [vmem:[#allocation2 + $0x8] sm:$0xf]
    %v60 = vld [vmem:[#allocation2 + $0xc] sm:$0xf]
    %v61 = vld [vmem:[#allocation2 + $0x10] sm:$0xf]
    %v62 = vld [vmem:[#allocation2 + $0x14] sm:$0xf]
    %v63 = vld [vmem:[#allocation2 + $0x18] sm:$0xf]
    %v64 = vld [vmem:[#allocation2 + $0x1c] sm:$0xf]
    %v65 = vld [vmem:[#allocation5] sm:$0xf]
    %v66 = vld [vmem:[#allocation5 + $0x4] sm:$0xf]
    %v67 = vld [vmem:[#allocation5 + $0x8] sm:$0xf]
    %v68 = vld [vmem:[#allocation5 + $0xc] sm:$0xf]
    %v69 = vld [vmem:[#allocation5 + $0x10] sm:$0xf]
    %v70 = vld [vmem:[#allocation5 + $0x14] sm:$0xf]
    %v71 = vld [vmem:[#allocation5 + $0x18] sm:$0xf]
    %v72 = vld [vmem:[#allocation5 + $0x1c] sm:$0xf]
    %v73 = vld [vmem:[#allocation7] sm:$0xf]
    %v74 = vld [vmem:[#allocation7 + $0x4] sm:$0xf]
    %v75 = vld [vmem:[#allocation7 + $0x8] sm:$0xf]
    %v76 = vld [vmem:[#allocation7 + $0xc] sm:$0xf]
    %v77 = vld [vmem:[#allocation7 + $0x10] sm:$0xf]
    %v78 = vld [vmem:[#allocation7 + $0x14] sm:$0xf]
    %v79 = vld [vmem:[#allocation7 + $0x18] sm:$0xf]
    %v80 = vld [vmem:[#allocation7 + $0x1c] sm:$0xf]
    %vm81 = vcmask 261120
    %v83 = vsel %vm81, %v57, 0
    %v86 = vsel %vm81, %v65, 0
    %88 = vmatprep.subr.bf16.mxu0 0
    %89 = vmatpush1.bf16.xpose.msra.mxu0 0
    %90 = vmatprep.subr.bf16.mxu0 0
    %91 = vmatpush1.bf16.xpose.msra.mxu0 0
    %92 = vmatprep.subr.bf16.mxu0 0
    %93 = vmatpush1.bf16.xpose.msra.mxu0 0
    %94 = vmatprep.subr.bf16.mxu0 0
    %95 = vmatpush1.bf16.xpose.msra.mxu0 0
    %96 = vmatprep.subr.bf16.mxu0 0
    %97 = vmatpush1.bf16.xpose.msra.mxu0 0
    %98 = vmatprep.subr.bf16.mxu0 0
    %99 = vmatpush1.bf16.xpose.msra.mxu0 0
    %100 = vmatprep.subr.bf16.mxu0 0
    %101 = vmatpush1.bf16.xpose.msra.mxu0 0
    %102 = vmatprep.subr.bf16.mxu0 0
    %103 = vmatpush1.bf16.xpose.msra.mxu0 %v86
    %104 = vmatprep.subr.bf16.mxu0 0
    %105 = vmatpush2.bf16.xpose.msra.mxu0 0
    %106 = vmatprep.subr.bf16.mxu0 0
    %107 = vmatpush2.bf16.xpose.msra.mxu0 0
    %108 = vmatprep.subr.bf16.mxu0 0
    %109 = vmatpush2.bf16.xpose.msra.mxu0 0
    %110 = vmatprep.subr.bf16.mxu0 0
    %111 = vmatpush2.bf16.xpose.msra.mxu0 0
    %112 = vmatprep.subr.bf16.mxu0 0
    %113 = vmatpush2.bf16.xpose.msra.mxu0 0
    %114 = vmatprep.subr.bf16.mxu0 0
    %115 = vmatpush2.bf16.xpose.msra.mxu0 0
    %116 = vmatprep.subr.bf16.mxu0 0
    %117 = vmatpush2.bf16.xpose.msra.mxu0 0
    %118 = vmatprep.subr.bf16.mxu0 0
    %119 = vmatpush2.bf16.xpose.msra.mxu0 0
    %120 = vmatprep.mubr.bf16.mxu0 0
    %121 = vmatmul.mubr.bf16.gmra.mxu0 %v83
    %v122 = vpop.f32.mrf.mxu0
    %v123 = vadd.f32 0.0, %v122
    %v124 = vpop.f32.mrf.mxu0
    %v125 = vpop.f32.mrf.mxu0
    %v126 = vpop.f32.mrf.mxu0
    %127 = vdwg.mxu0
    %v129 = vsel %vm81, %v58, 0
    %v132 = vsel %vm81, %v66, 0
    %134 = vmatprep.subr.bf16.mxu0 0
    %135 = vmatpush1.bf16.xpose.msra.mxu0 0
    %136 = vmatprep.subr.bf16.mxu0 0
    %137 = vmatpush1.bf16.xpose.msra.mxu0 0
    %138 = vmatprep.subr.bf16.mxu0 0
    %139 = vmatpush1.bf16.xpose.msra.mxu0 0
    %140 = vmatprep.subr.bf16.mxu0 0
    %141 = vmatpush1.bf16.xpose.msra.mxu0 0
    %142 = vmatprep.subr.bf16.mxu0 0
    %143 = vmatpush1.bf16.xpose.msra.mxu0 0
    %144 = vmatprep.subr.bf16.mxu0 0
    %145 = vmatpush1.bf16.xpose.msra.mxu0 0
    %146 = vmatprep.subr.bf16.mxu0 0
    %147 = vmatpush1.bf16.xpose.msra.mxu0 0
    %148 = vmatprep.subr.bf16.mxu0 0
    %149 = vmatpush1.bf16.xpose.msra.mxu0 %v132
    %150 = vmatprep.subr.bf16.mxu0 0
    %151 = vmatpush2.bf16.xpose.msra.mxu0 0
    %152 = vmatprep.subr.bf16.mxu0 0
    %153 = vmatpush2.bf16.xpose.msra.mxu0 0
    %154 = vmatprep.subr.bf16.mxu0 0
    %155 = vmatpush2.bf16.xpose.msra.mxu0 0
    %156 = vmatprep.subr.bf16.mxu0 0
    %157 = vmatpush2.bf16.xpose.msra.mxu0 0
    %158 = vmatprep.subr.bf16.mxu0 0
    %159 = vmatpush2.bf16.xpose.msra.mxu0 0
    %160 = vmatprep.subr.bf16.mxu0 0
    %161 = vmatpush2.bf16.xpose.msra.mxu0 0
    %162 = vmatprep.subr.bf16.mxu0 0
    %163 = vmatpush2.bf16.xpose.msra.mxu0 0
    %164 = vmatprep.subr.bf16.mxu0 0
    %165 = vmatpush2.bf16.xpose.msra.mxu0 0
    %166 = vmatprep.mubr.bf16.mxu0 0
    %167 = vmatmul.mubr.bf16.gmra.mxu0 %v129
    %v168 = vpop.f32.mrf.mxu0
    %v169 = vadd.f32 0.0, %v168
    %v170 = vpop.f32.mrf.mxu0
    %v171 = vpop.f32.mrf.mxu0
    %v172 = vpop.f32.mrf.mxu0
    %173 = vdwg.mxu0
    %v175 = vsel %vm81, %v59, 0
    %v178 = vsel %vm81, %v67, 0
    %180 = vmatprep.subr.bf16.mxu0 0
    %181 = vmatpush1.bf16.xpose.msra.mxu0 0
    %182 = vmatprep.subr.bf16.mxu0 0
    %183 = vmatpush1.bf16.xpose.msra.mxu0 0
    %184 = vmatprep.subr.bf16.mxu0 0
    %185 = vmatpush1.bf16.xpose.msra.mxu0 0
    %186 = vmatprep.subr.bf16.mxu0 0
    %187 = vmatpush1.bf16.xpose.msra.mxu0 0
    %188 = vmatprep.subr.bf16.mxu0 0
    %189 = vmatpush1.bf16.xpose.msra.mxu0 0
    %190 = vmatprep.subr.bf16.mxu0 0
    %191 = vmatpush1.bf16.xpose.msra.mxu0 0
    %192 = vmatprep.subr.bf16.mxu0 0
    %193 = vmatpush1.bf16.xpose.msra.mxu0 0
    %194 = vmatprep.subr.bf16.mxu0 0
    %195 = vmatpush1.bf16.xpose.msra.mxu0 %v178
    %196 = vmatprep.subr.bf16.mxu0 0
    %197 = vmatpush2.bf16.xpose.msra.mxu0 0
    %198 = vmatprep.subr.bf16.mxu0 0
    %199 = vmatpush2.bf16.xpose.msra.mxu0 0
    %200 = vmatprep.subr.bf16.mxu0 0
    %201 = vmatpush2.bf16.xpose.msra.mxu0 0
    %202 = vmatprep.subr.bf16.mxu0 0
    %203 = vmatpush2.bf16.xpose.msra.mxu0 0
    %204 = vmatprep.subr.bf16.mxu0 0
    %205 = vmatpush2.bf16.xpose.msra.mxu0 0
    %206 = vmatprep.subr.bf16.mxu0 0
    %207 = vmatpush2.bf16.xpose.msra.mxu0 0
    %208 = vmatprep.subr.bf16.mxu0 0
    %209 = vmatpush2.bf16.xpose.msra.mxu0 0
    %210 = vmatprep.subr.bf16.mxu0 0
    %211 = vmatpush2.bf16.xpose.msra.mxu0 0
    %212 = vmatprep.mubr.bf16.mxu0 0
    %213 = vmatmul.mubr.bf16.gmra.mxu0 %v175
    %v214 = vpop.f32.mrf.mxu0
    %v215 = vadd.f32 0.0, %v214
    %v216 = vpop.f32.mrf.mxu0
    %v217 = vpop.f32.mrf.mxu0
    %v218 = vpop.f32.mrf.mxu0
    %219 = vdwg.mxu0
    %v221 = vsel %vm81, %v60, 0
    %v224 = vsel %vm81, %v68, 0
    %226 = vmatprep.subr.bf16.mxu0 0
    %227 = vmatpush1.bf16.xpose.msra.mxu0 0
    %228 = vmatprep.subr.bf16.mxu0 0
    %229 = vmatpush1.bf16.xpose.msra.mxu0 0
    %230 = vmatprep.subr.bf16.mxu0 0
    %231 = vmatpush1.bf16.xpose.msra.mxu0 0
    %232 = vmatprep.subr.bf16.mxu0 0
    %233 = vmatpush1.bf16.xpose.msra.mxu0 0
    %234 = vmatprep.subr.bf16.mxu0 0
    %235 = vmatpush1.bf16.xpose.msra.mxu0 0
    %236 = vmatprep.subr.bf16.mxu0 0
    %237 = vmatpush1.bf16.xpose.msra.mxu0 0
    %238 = vmatprep.subr.bf16.mxu0 0
    %239 = vmatpush1.bf16.xpose.msra.mxu0 0
    %240 = vmatprep.subr.bf16.mxu0 0
    %241 = vmatpush1.bf16.xpose.msra.mxu0 %v224
    %242 = vmatprep.subr.bf16.mxu0 0
    %243 = vmatpush2.bf16.xpose.msra.mxu0 0
    %244 = vmatprep.subr.bf16.mxu0 0
    %245 = vmatpush2.bf16.xpose.msra.mxu0 0
    %246 = vmatprep.subr.bf16.mxu0 0
    %247 = vmatpush2.bf16.xpose.msra.mxu0 0
    %248 = vmatprep.subr.bf16.mxu0 0
    %249 = vmatpush2.bf16.xpose.msra.mxu0 0
    %250 = vmatprep.subr.bf16.mxu0 0
    %251 = vmatpush2.bf16.xpose.msra.mxu0 0
    %252 = vmatprep.subr.bf16.mxu0 0
    %253 = vmatpush2.bf16.xpose.msra.mxu0 0
    %254 = vmatprep.subr.bf16.mxu0 0
    %255 = vmatpush2.bf16.xpose.msra.mxu0 0
    %256 = vmatprep.subr.bf16.mxu0 0
    %257 = vmatpush2.bf16.xpose.msra.mxu0 0
    %258 = vmatprep.mubr.bf16.mxu0 0
    %259 = vmatmul.mubr.bf16.gmra.mxu0 %v221
    %v260 = vpop.f32.mrf.mxu0
    %v261 = vadd.f32 0.0, %v260
    %v262 = vpop.f32.mrf.mxu0
    %v263 = vpop.f32.mrf.mxu0
    %v264 = vpop.f32.mrf.mxu0
    %265 = vdwg.mxu0
    %v267 = vsel %vm81, %v61, 0
    %v270 = vsel %vm81, %v69, 0
    %272 = vmatprep.subr.bf16.mxu0 0
    %273 = vmatpush1.bf16.xpose.msra.mxu0 0
    %274 = vmatprep.subr.bf16.mxu0 0
    %275 = vmatpush1.bf16.xpose.msra.mxu0 0
    %276 = vmatprep.subr.bf16.mxu0 0
    %277 = vmatpush1.bf16.xpose.msra.mxu0 0
    %278 = vmatprep.subr.bf16.mxu0 0
    %279 = vmatpush1.bf16.xpose.msra.mxu0 0
    %280 = vmatprep.subr.bf16.mxu0 0
    %281 = vmatpush1.bf16.xpose.msra.mxu0 0
    %282 = vmatprep.subr.bf16.mxu0 0
    %283 = vmatpush1.bf16.xpose.msra.mxu0 0
    %284 = vmatprep.subr.bf16.mxu0 0
    %285 = vmatpush1.bf16.xpose.msra.mxu0 0
    %286 = vmatprep.subr.bf16.mxu0 0
    %287 = vmatpush1.bf16.xpose.msra.mxu0 %v270
    %288 = vmatprep.subr.bf16.mxu0 0
    %289 = vmatpush2.bf16.xpose.msra.mxu0 0
    %290 = vmatprep.subr.bf16.mxu0 0
    %291 = vmatpush2.bf16.xpose.msra.mxu0 0
    %292 = vmatprep.subr.bf16.mxu0 0
    %293 = vmatpush2.bf16.xpose.msra.mxu0 0
    %294 = vmatprep.subr.bf16.mxu0 0
    %295 = vmatpush2.bf16.xpose.msra.mxu0 0
    %296 = vmatprep.subr.bf16.mxu0 0
    %297 = vmatpush2.bf16.xpose.msra.mxu0 0
    %298 = vmatprep.subr.bf16.mxu0 0
    %299 = vmatpush2.bf16.xpose.msra.mxu0 0
    %300 = vmatprep.subr.bf16.mxu0 0
    %301 = vmatpush2.bf16.xpose.msra.mxu0 0
    %302 = vmatprep.subr.bf16.mxu0 0
    %303 = vmatpush2.bf16.xpose.msra.mxu0 0
    %304 = vmatprep.mubr.bf16.mxu0 0
    %305 = vmatmul.mubr.bf16.gmra.mxu0 %v267
    %v306 = vpop.f32.mrf.mxu0
    %v307 = vadd.f32 0.0, %v306
    %v308 = vpop.f32.mrf.mxu0
    %v309 = vpop.f32.mrf.mxu0
    %v310 = vpop.f32.mrf.mxu0
    %311 = vdwg.mxu0
    %v313 = vsel %vm81, %v62, 0
    %v316 = vsel %vm81, %v70, 0
    %318 = vmatprep.subr.bf16.mxu0 0
    %319 = vmatpush1.bf16.xpose.msra.mxu0 0
    %320 = vmatprep.subr.bf16.mxu0 0
    %321 = vmatpush1.bf16.xpose.msra.mxu0 0
    %322 = vmatprep.subr.bf16.mxu0 0
    %323 = vmatpush1.bf16.xpose.msra.mxu0 0
    %324 = vmatprep.subr.bf16.mxu0 0
    %325 = vmatpush1.bf16.xpose.msra.mxu0 0
    %326 = vmatprep.subr.bf16.mxu0 0
    %327 = vmatpush1.bf16.xpose.msra.mxu0 0
    %328 = vmatprep.subr.bf16.mxu0 0
    %329 = vmatpush1.bf16.xpose.msra.mxu0 0
    %330 = vmatprep.subr.bf16.mxu0 0
    %331 = vmatpush1.bf16.xpose.msra.mxu0 0
    %332 = vmatprep.subr.bf16.mxu0 0
    %333 = vmatpush1.bf16.xpose.msra.mxu0 %v316
    %334 = vmatprep.subr.bf16.mxu0 0
    %335 = vmatpush2.bf16.xpose.msra.mxu0 0
    %336 = vmatprep.subr.bf16.mxu0 0
    %337 = vmatpush2.bf16.xpose.msra.mxu0 0
    %338 = vmatprep.subr.bf16.mxu0 0
    %339 = vmatpush2.bf16.xpose.msra.mxu0 0
    %340 = vmatprep.subr.bf16.mxu0 0
    %341 = vmatpush2.bf16.xpose.msra.mxu0 0
    %342 = vmatprep.subr.bf16.mxu0 0
    %343 = vmatpush2.bf16.xpose.msra.mxu0 0
    %344 = vmatprep.subr.bf16.mxu0 0
    %345 = vmatpush2.bf16.xpose.msra.mxu0 0
    %346 = vmatprep.subr.bf16.mxu0 0
    %347 = vmatpush2.bf16.xpose.msra.mxu0 0
    %348 = vmatprep.subr.bf16.mxu0 0
    %349 = vmatpush2.bf16.xpose.msra.mxu0 0
    %350 = vmatprep.mubr.bf16.mxu0 0
    %351 = vmatmul.mubr.bf16.gmra.mxu0 %v313
    %v352 = vpop.f32.mrf.mxu0
    %v353 = vadd.f32 0.0, %v352
    %v354 = vpop.f32.mrf.mxu0
    %v355 = vpop.f32.mrf.mxu0
    %v356 = vpop.f32.mrf.mxu0
    %357 = vdwg.mxu0
    %v359 = vsel %vm81, %v63, 0
    %v362 = vsel %vm81, %v71, 0
    %364 = vmatprep.subr.bf16.mxu0 0
    %365 = vmatpush1.bf16.xpose.msra.mxu0 0
    %366 = vmatprep.subr.bf16.mxu0 0
    %367 = vmatpush1.bf16.xpose.msra.mxu0 0
    %368 = vmatprep.subr.bf16.mxu0 0
    %369 = vmatpush1.bf16.xpose.msra.mxu0 0
    %370 = vmatprep.subr.bf16.mxu0 0
    %371 = vmatpush1.bf16.xpose.msra.mxu0 0
    %372 = vmatprep.subr.bf16.mxu0 0
    %373 = vmatpush1.bf16.xpose.msra.mxu0 0
    %374 = vmatprep.subr.bf16.mxu0 0
    %375 = vmatpush1.bf16.xpose.msra.mxu0 0
    %376 = vmatprep.subr.bf16.mxu0 0
    %377 = vmatpush1.bf16.xpose.msra.mxu0 0
    %378 = vmatprep.subr.bf16.mxu0 0
    %379 = vmatpush1.bf16.xpose.msra.mxu0 %v362
    %380 = vmatprep.subr.bf16.mxu0 0
    %381 = vmatpush2.bf16.xpose.msra.mxu0 0
    %382 = vmatprep.subr.bf16.mxu0 0
    %383 = vmatpush2.bf16.xpose.msra.mxu0 0
    %384 = vmatprep.subr.bf16.mxu0 0
    %385 = vmatpush2.bf16.xpose.msra.mxu0 0
    %386 = vmatprep.subr.bf16.mxu0 0
    %387 = vmatpush2.bf16.xpose.msra.mxu0 0
    %388 = vmatprep.subr.bf16.mxu0 0
    %389 = vmatpush2.bf16.xpose.msra.mxu0 0
    %390 = vmatprep.subr.bf16.mxu0 0
    %391 = vmatpush2.bf16.xpose.msra.mxu0 0
    %392 = vmatprep.subr.bf16.mxu0 0
    %393 = vmatpush2.bf16.xpose.msra.mxu0 0
    %394 = vmatprep.subr.bf16.mxu0 0
    %395 = vmatpush2.bf16.xpose.msra.mxu0 0
    %396 = vmatprep.mubr.bf16.mxu0 0
    %397 = vmatmul.mubr.bf16.gmra.mxu0 %v359
    %v398 = vpop.f32.mrf.mxu0
    %v399 = vadd.f32 0.0, %v398
    %v400 = vpop.f32.mrf.mxu0
    %v401 = vpop.f32.mrf.mxu0
    %v402 = vpop.f32.mrf.mxu0
    %403 = vdwg.mxu0
    %v405 = vsel %vm81, %v64, 0
    %v408 = vsel %vm81, %v72, 0
    %410 = vmatprep.subr.bf16.mxu0 0
    %411 = vmatpush1.bf16.xpose.msra.mxu0 0
    %412 = vmatprep.subr.bf16.mxu0 0
    %413 = vmatpush1.bf16.xpose.msra.mxu0 0
    %414 = vmatprep.subr.bf16.mxu0 0
    %415 = vmatpush1.bf16.xpose.msra.mxu0 0
    %416 = vmatprep.subr.bf16.mxu0 0
    %417 = vmatpush1.bf16.xpose.msra.mxu0 0
    %418 = vmatprep.subr.bf16.mxu0 0
    %419 = vmatpush1.bf16.xpose.msra.mxu0 0
    %420 = vmatprep.subr.bf16.mxu0 0
    %421 = vmatpush1.bf16.xpose.msra.mxu0 0
    %422 = vmatprep.subr.bf16.mxu0 0
    %423 = vmatpush1.bf16.xpose.msra.mxu0 0
    %424 = vmatprep.subr.bf16.mxu0 0
    %425 = vmatpush1.bf16.xpose.msra.mxu0 %v408
    %426 = vmatprep.subr.bf16.mxu0 0
    %427 = vmatpush2.bf16.xpose.msra.mxu0 0
    %428 = vmatprep.subr.bf16.mxu0 0
    %429 = vmatpush2.bf16.xpose.msra.mxu0 0
    %430 = vmatprep.subr.bf16.mxu0 0
    %431 = vmatpush2.bf16.xpose.msra.mxu0 0
    %432 = vmatprep.subr.bf16.mxu0 0
    %433 = vmatpush2.bf16.xpose.msra.mxu0 0
    %434 = vmatprep.subr.bf16.mxu0 0
    %435 = vmatpush2.bf16.xpose.msra.mxu0 0
    %436 = vmatprep.subr.bf16.mxu0 0
    %437 = vmatpush2.bf16.xpose.msra.mxu0 0
    %438 = vmatprep.subr.bf16.mxu0 0
    %439 = vmatpush2.bf16.xpose.msra.mxu0 0
    %440 = vmatprep.subr.bf16.mxu0 0
    %441 = vmatpush2.bf16.xpose.msra.mxu0 0
    %442 = vmatprep.mubr.bf16.mxu0 0
    %443 = vmatmul.mubr.bf16.gmra.mxu0 %v405
    %v444 = vpop.f32.mrf.mxu0
    %v445 = vadd.f32 0.0, %v444
    %v446 = vpop.f32.mrf.mxu0
    %v447 = vpop.f32.mrf.mxu0
    %v448 = vpop.f32.mrf.mxu0
    %449 = vdwg.mxu0
    %v450 = vmul.f32 %v123, 0.17677669
    %v451 = vmul.f32 %v169, 0.17677669
    %v452 = vmul.f32 %v215, 0.17677669
    %v453 = vmul.f32 %v261, 0.17677669
    %v454 = vmul.f32 %v307, 0.17677669
    %v455 = vmul.f32 %v353, 0.17677669
    %v456 = vmul.f32 %v399, 0.17677669
    %v457 = vmul.f32 %v445, 0.17677669
    %vm458 = vcmask 64512
    %v459 = vsel %vm458, %v450, -inf
    %460 = vmax.xlane.f32.xlu0 %v459
    %v461 = vpop.xlane.xlu0 %460
    %v462 = vsel %vm458, %v451, -inf
    %463 = vmax.xlane.f32.xlu0 %v462
    %v464 = vpop.xlane.xlu0 %463
    %v465 = vsel %vm458, %v452, -inf
    %466 = vmax.xlane.f32.xlu0 %v465
    %v467 = vpop.xlane.xlu0 %466
    %v468 = vsel %vm458, %v453, -inf
    %469 = vmax.xlane.f32.xlu0 %v468
    %v470 = vpop.xlane.xlu0 %469
    %v471 = vsel %vm458, %v454, -inf
    %472 = vmax.xlane.f32.xlu0 %v471
    %v473 = vpop.xlane.xlu0 %472
    %v474 = vsel %vm458, %v455, -inf
    %475 = vmax.xlane.f32.xlu0 %v474
    %v476 = vpop.xlane.xlu0 %475
    %v477 = vsel %vm458, %v456, -inf
    %478 = vmax.xlane.f32.xlu0 %v477
    %v479 = vpop.xlane.xlu0 %478
    %v480 = vsel %vm458, %v457, -inf
    %481 = vmax.xlane.f32.xlu0 %v480
    %v482 = vpop.xlane.xlu0 %481
    %v483 = vsub.f32 %v450, %v461
    %v484 = vsub.f32 %v451, %v464
    %v485 = vsub.f32 %v452, %v467
    %v486 = vsub.f32 %v453, %v470
    %v487 = vsub.f32 %v454, %v473
    %v488 = vsub.f32 %v455, %v476
    %v489 = vsub.f32 %v456, %v479
    %v490 = vsub.f32 %v457, %v482
    %v491 = vpack.c.bf16 %v483, %v483
    %v492 = vpack.c.bf16 %v484, %v484
    %v493 = vpack.c.bf16 %v485, %v485
    %v494 = vpack.c.bf16 %v486, %v486
    %v495 = vpack.c.bf16 %v487, %v487
    %v496 = vpack.c.bf16 %v488, %v488
    %v497 = vpack.c.bf16 %v489, %v489
    %v498 = vpack.c.bf16 %v490, %v490
    %v500 = vmul.bf16 %v491, 1069105081
    %v501 = vpow.bf16.pop %v500
    %v503 = vmul.bf16 %v492, 1069105081
    %v504 = vpow.bf16.pop %v503
    %v506 = vmul.bf16 %v493, 1069105081
    %v507 = vpow.bf16.pop %v506
    %v509 = vmul.bf16 %v494, 1069105081
    %v510 = vpow.bf16.pop %v509
    %v512 = vmul.bf16 %v495, 1069105081
    %v513 = vpow.bf16.pop %v512
    %v515 = vmul.bf16 %v496, 1069105081
    %v516 = vpow.bf16.pop %v515
    %v518 = vmul.bf16 %v497, 1069105081
    %v519 = vpow.bf16.pop %v518
    %v521 = vmul.bf16 %v498, 1069105081
    %v522 = vpow.bf16.pop %v521
    %v523 = vunpack.c.l.bf16 %v501
    %v524 = vunpack.c.l.bf16 %v504
    %v525 = vunpack.c.l.bf16 %v507
    %v526 = vunpack.c.l.bf16 %v510
    %v527 = vunpack.c.l.bf16 %v513
    %v528 = vunpack.c.l.bf16 %v516
    %v529 = vunpack.c.l.bf16 %v519
    %v530 = vunpack.c.l.bf16 %v522
    %v531 = vsel %vm458, %v523, 0.0
    %532 = vadd.xlane.f32.xlu0 %v531
    %v533 = vpop.xlane.xlu0 %532
    %v534 = vsel %vm458, %v524, 0.0
    %535 = vadd.xlane.f32.xlu0 %v534
    %v536 = vpop.xlane.xlu0 %535
    %v537 = vsel %vm458, %v525, 0.0
    %538 = vadd.xlane.f32.xlu0 %v537
    %v539 = vpop.xlane.xlu0 %538
    %v540 = vsel %vm458, %v526, 0.0
    %541 = vadd.xlane.f32.xlu0 %v540
    %v542 = vpop.xlane.xlu0 %541
    %v543 = vsel %vm458, %v527, 0.0
    %544 = vadd.xlane.f32.xlu0 %v543
    %v545 = vpop.xlane.xlu0 %544
    %v546 = vsel %vm458, %v528, 0.0
    %547 = vadd.xlane.f32.xlu0 %v546
    %v548 = vpop.xlane.xlu0 %547
    %v549 = vsel %vm458, %v529, 0.0
    %550 = vadd.xlane.f32.xlu0 %v549
    %v551 = vpop.xlane.xlu0 %550
    %v552 = vsel %vm458, %v530, 0.0
    %553 = vadd.xlane.f32.xlu0 %v552
    %v554 = vpop.xlane.xlu0 %553
    %v556 = vsel %vm458, %v501, 0
    %vm558 = vcmask 1043456
    %v560 = vsel %vm558, %v73, 0
    %562 = vmatprep.subr.bf16.mxu0 0
    %563 = vmatpush1.bf16.msra.mxu0 0
    %564 = vmatprep.subr.bf16.mxu0 0
    %565 = vmatpush1.bf16.msra.mxu0 0
    %566 = vmatprep.subr.bf16.mxu0 0
    %567 = vmatpush1.bf16.msra.mxu0 0
    %568 = vmatprep.subr.bf16.mxu0 0
    %569 = vmatpush1.bf16.msra.mxu0 0
    %570 = vmatprep.subr.bf16.mxu0 0
    %571 = vmatpush1.bf16.msra.mxu0 0
    %572 = vmatprep.subr.bf16.mxu0 0
    %573 = vmatpush1.bf16.msra.mxu0 0
    %574 = vmatprep.subr.bf16.mxu0 0
    %575 = vmatpush1.bf16.msra.mxu0 0
    %576 = vmatprep.subr.bf16.mxu0 0
    %577 = vmatpush1.bf16.msra.mxu0 %v560
    %578 = vmatprep.subr.bf16.mxu0 0
    %579 = vmatpush2.bf16.msra.mxu0 0
    %580 = vmatprep.subr.bf16.mxu0 0
    %581 = vmatpush2.bf16.msra.mxu0 0
    %582 = vmatprep.subr.bf16.mxu0 0
    %583 = vmatpush2.bf16.msra.mxu0 0
    %584 = vmatprep.subr.bf16.mxu0 0
    %585 = vmatpush2.bf16.msra.mxu0 0
    %586 = vmatprep.subr.bf16.mxu0 0
    %587 = vmatpush2.bf16.msra.mxu0 0
    %588 = vmatprep.subr.bf16.mxu0 0
    %589 = vmatpush2.bf16.msra.mxu0 0
    %590 = vmatprep.subr.bf16.mxu0 0
    %591 = vmatpush2.bf16.msra.mxu0 0
    %592 = vmatprep.subr.bf16.mxu0 0
    %593 = vmatpush2.bf16.msra.mxu0 0
    %594 = vmatprep.mubr.bf16.mxu0 0
    %595 = vmatmul.mubr.bf16.gmra.mxu0 %v556
    %v596 = vpop.f32.mrf.mxu0
    %v597 = vadd.f32 0.0, %v596
    %v598 = vpop.f32.mrf.mxu0
    %v599 = vpop.f32.mrf.mxu0
    %v600 = vpop.f32.mrf.mxu0
    %601 = vdwg.mxu0
    %v603 = vsel %vm458, %v504, 0
    %v606 = vsel %vm558, %v74, 0
    %608 = vmatprep.subr.bf16.mxu0 0
    %609 = vmatpush1.bf16.msra.mxu0 0
    %610 = vmatprep.subr.bf16.mxu0 0
    %611 = vmatpush1.bf16.msra.mxu0 0
    %612 = vmatprep.subr.bf16.mxu0 0
    %613 = vmatpush1.bf16.msra.mxu0 0
    %614 = vmatprep.subr.bf16.mxu0 0
    %615 = vmatpush1.bf16.msra.mxu0 0
    %616 = vmatprep.subr.bf16.mxu0 0
    %617 = vmatpush1.bf16.msra.mxu0 0
    %618 = vmatprep.subr.bf16.mxu0 0
    %619 = vmatpush1.bf16.msra.mxu0 0
    %620 = vmatprep.subr.bf16.mxu0 0
    %621 = vmatpush1.bf16.msra.mxu0 0
    %622 = vmatprep.subr.bf16.mxu0 0
    %623 = vmatpush1.bf16.msra.mxu0 %v606
    %624 = vmatprep.subr.bf16.mxu0 0
    %625 = vmatpush2.bf16.msra.mxu0 0
    %626 = vmatprep.subr.bf16.mxu0 0
    %627 = vmatpush2.bf16.msra.mxu0 0
    %628 = vmatprep.subr.bf16.mxu0 0
    %629 = vmatpush2.bf16.msra.mxu0 0
    %630 = vmatprep.subr.bf16.mxu0 0
    %631 = vmatpush2.bf16.msra.mxu0 0
    %632 = vmatprep.subr.bf16.mxu0 0
    %633 = vmatpush2.bf16.msra.mxu0 0
    %634 = vmatprep.subr.bf16.mxu0 0
    %635 = vmatpush2.bf16.msra.mxu0 0
    %636 = vmatprep.subr.bf16.mxu0 0
    %637 = vmatpush2.bf16.msra.mxu0 0
    %638 = vmatprep.subr.bf16.mxu0 0
    %639 = vmatpush2.bf16.msra.mxu0 0
    %640 = vmatprep.mubr.bf16.mxu0 0
    %641 = vmatmul.mubr.bf16.gmra.mxu0 %v603
    %v642 = vpop.f32.mrf.mxu0
    %v643 = vadd.f32 0.0, %v642
    %v644 = vpop.f32.mrf.mxu0
    %v645 = vpop.f32.mrf.mxu0
    %v646 = vpop.f32.mrf.mxu0
    %647 = vdwg.mxu0
    %v649 = vsel %vm458, %v507, 0
    %v652 = vsel %vm558, %v75, 0
    %654 = vmatprep.subr.bf16.mxu0 0
    %655 = vmatpush1.bf16.msra.mxu0 0
    %656 = vmatprep.subr.bf16.mxu0 0
    %657 = vmatpush1.bf16.msra.mxu0 0
    %658 = vmatprep.subr.bf16.mxu0 0
    %659 = vmatpush1.bf16.msra.mxu0 0
    %660 = vmatprep.subr.bf16.mxu0 0
    %661 = vmatpush1.bf16.msra.mxu0 0
    %662 = vmatprep.subr.bf16.mxu0 0
    %663 = vmatpush1.bf16.msra.mxu0 0
    %664 = vmatprep.subr.bf16.mxu0 0
    %665 = vmatpush1.bf16.msra.mxu0 0
    %666 = vmatprep.subr.bf16.mxu0 0
    %667 = vmatpush1.bf16.msra.mxu0 0
    %668 = vmatprep.subr.bf16.mxu0 0
    %669 = vmatpush1.bf16.msra.mxu0 %v652
    %670 = vmatprep.subr.bf16.mxu0 0
    %671 = vmatpush2.bf16.msra.mxu0 0
    %672 = vmatprep.subr.bf16.mxu0 0
    %673 = vmatpush2.bf16.msra.mxu0 0
    %674 = vmatprep.subr.bf16.mxu0 0
    %675 = vmatpush2.bf16.msra.mxu0 0
    %676 = vmatprep.subr.bf16.mxu0 0
    %677 = vmatpush2.bf16.msra.mxu0 0
    %678 = vmatprep.subr.bf16.mxu0 0
    %679 = vmatpush2.bf16.msra.mxu0 0
    %680 = vmatprep.subr.bf16.mxu0 0
    %681 = vmatpush2.bf16.msra.mxu0 0
    %682 = vmatprep.subr.bf16.mxu0 0
    %683 = vmatpush2.bf16.msra.mxu0 0
    %684 = vmatprep.subr.bf16.mxu0 0
    %685 = vmatpush2.bf16.msra.mxu0 0
    %686 = vmatprep.mubr.bf16.mxu0 0
    %687 = vmatmul.mubr.bf16.gmra.mxu0 %v649
    %v688 = vpop.f32.mrf.mxu0
    %v689 = vadd.f32 0.0, %v688
    %v690 = vpop.f32.mrf.mxu0
    %v691 = vpop.f32.mrf.mxu0
    %v692 = vpop.f32.mrf.mxu0
    %693 = vdwg.mxu0
    %v695 = vsel %vm458, %v510, 0
    %v698 = vsel %vm558, %v76, 0
    %700 = vmatprep.subr.bf16.mxu0 0
    %701 = vmatpush1.bf16.msra.mxu0 0
    %702 = vmatprep.subr.bf16.mxu0 0
    %703 = vmatpush1.bf16.msra.mxu0 0
    %704 = vmatprep.subr.bf16.mxu0 0
    %705 = vmatpush1.bf16.msra.mxu0 0
    %706 = vmatprep.subr.bf16.mxu0 0
    %707 = vmatpush1.bf16.msra.mxu0 0
    %708 = vmatprep.subr.bf16.mxu0 0
    %709 = vmatpush1.bf16.msra.mxu0 0
    %710 = vmatprep.subr.bf16.mxu0 0
    %711 = vmatpush1.bf16.msra.mxu0 0
    %712 = vmatprep.subr.bf16.mxu0 0
    %713 = vmatpush1.bf16.msra.mxu0 0
    %714 = vmatprep.subr.bf16.mxu0 0
    %715 = vmatpush1.bf16.msra.mxu0 %v698
    %716 = vmatprep.subr.bf16.mxu0 0
    %717 = vmatpush2.bf16.msra.mxu0 0
    %718 = vmatprep.subr.bf16.mxu0 0
    %719 = vmatpush2.bf16.msra.mxu0 0
    %720 = vmatprep.subr.bf16.mxu0 0
    %721 = vmatpush2.bf16.msra.mxu0 0
    %722 = vmatprep.subr.bf16.mxu0 0
    %723 = vmatpush2.bf16.msra.mxu0 0
    %724 = vmatprep.subr.bf16.mxu0 0
    %725 = vmatpush2.bf16.msra.mxu0 0
    %726 = vmatprep.subr.bf16.mxu0 0
    %727 = vmatpush2.bf16.msra.mxu0 0
    %728 = vmatprep.subr.bf16.mxu0 0
    %729 = vmatpush2.bf16.msra.mxu0 0
    %730 = vmatprep.subr.bf16.mxu0 0
    %731 = vmatpush2.bf16.msra.mxu0 0
    %732 = vmatprep.mubr.bf16.mxu0 0
    %733 = vmatmul.mubr.bf16.gmra.mxu0 %v695
    %v734 = vpop.f32.mrf.mxu0
    %v735 = vadd.f32 0.0, %v734
    %v736 = vpop.f32.mrf.mxu0
    %v737 = vpop.f32.mrf.mxu0
    %v738 = vpop.f32.mrf.mxu0
    %739 = vdwg.mxu0
    %v741 = vsel %vm458, %v513, 0
    %v744 = vsel %vm558, %v77, 0
    %746 = vmatprep.subr.bf16.mxu0 0
    %747 = vmatpush1.bf16.msra.mxu0 0
    %748 = vmatprep.subr.bf16.mxu0 0
    %749 = vmatpush1.bf16.msra.mxu0 0
    %750 = vmatprep.subr.bf16.mxu0 0
    %751 = vmatpush1.bf16.msra.mxu0 0
    %752 = vmatprep.subr.bf16.mxu0 0
    %753 = vmatpush1.bf16.msra.mxu0 0
    %754 = vmatprep.subr.bf16.mxu0 0
    %755 = vmatpush1.bf16.msra.mxu0 0
    %756 = vmatprep.subr.bf16.mxu0 0
    %757 = vmatpush1.bf16.msra.mxu0 0
    %758 = vmatprep.subr.bf16.mxu0 0
    %759 = vmatpush1.bf16.msra.mxu0 0
    %760 = vmatprep.subr.bf16.mxu0 0
    %761 = vmatpush1.bf16.msra.mxu0 %v744
    %762 = vmatprep.subr.bf16.mxu0 0
    %763 = vmatpush2.bf16.msra.mxu0 0
    %764 = vmatprep.subr.bf16.mxu0 0
    %765 = vmatpush2.bf16.msra.mxu0 0
    %766 = vmatprep.subr.bf16.mxu0 0
    %767 = vmatpush2.bf16.msra.mxu0 0
    %768 = vmatprep.subr.bf16.mxu0 0
    %769 = vmatpush2.bf16.msra.mxu0 0
    %770 = vmatprep.subr.bf16.mxu0 0
    %771 = vmatpush2.bf16.msra.mxu0 0
    %772 = vmatprep.subr.bf16.mxu0 0
    %773 = vmatpush2.bf16.msra.mxu0 0
    %774 = vmatprep.subr.bf16.mxu0 0
    %775 = vmatpush2.bf16.msra.mxu0 0
    %776 = vmatprep.subr.bf16.mxu0 0
    %777 = vmatpush2.bf16.msra.mxu0 0
    %778 = vmatprep.mubr.bf16.mxu0 0
    %779 = vmatmul.mubr.bf16.gmra.mxu0 %v741
    %v780 = vpop.f32.mrf.mxu0
    %v781 = vadd.f32 0.0, %v780
    %v782 = vpop.f32.mrf.mxu0
    %v783 = vpop.f32.mrf.mxu0
    %v784 = vpop.f32.mrf.mxu0
    %785 = vdwg.mxu0
    %v787 = vsel %vm458, %v516, 0
    %v790 = vsel %vm558, %v78, 0
    %792 = vmatprep.subr.bf16.mxu0 0
    %793 = vmatpush1.bf16.msra.mxu0 0
    %794 = vmatprep.subr.bf16.mxu0 0
    %795 = vmatpush1.bf16.msra.mxu0 0
    %796 = vmatprep.subr.bf16.mxu0 0
    %797 = vmatpush1.bf16.msra.mxu0 0
    %798 = vmatprep.subr.bf16.mxu0 0
    %799 = vmatpush1.bf16.msra.mxu0 0
    %800 = vmatprep.subr.bf16.mxu0 0
    %801 = vmatpush1.bf16.msra.mxu0 0
    %802 = vmatprep.subr.bf16.mxu0 0
    %803 = vmatpush1.bf16.msra.mxu0 0
    %804 = vmatprep.subr.bf16.mxu0 0
    %805 = vmatpush1.bf16.msra.mxu0 0
    %806 = vmatprep.subr.bf16.mxu0 0
    %807 = vmatpush1.bf16.msra.mxu0 %v790
    %808 = vmatprep.subr.bf16.mxu0 0
    %809 = vmatpush2.bf16.msra.mxu0 0
    %810 = vmatprep.subr.bf16.mxu0 0
    %811 = vmatpush2.bf16.msra.mxu0 0
    %812 = vmatprep.subr.bf16.mxu0 0
    %813 = vmatpush2.bf16.msra.mxu0 0
    %814 = vmatprep.subr.bf16.mxu0 0
    %815 = vmatpush2.bf16.msra.mxu0 0
    %816 = vmatprep.subr.bf16.mxu0 0
    %817 = vmatpush2.bf16.msra.mxu0 0
    %818 = vmatprep.subr.bf16.mxu0 0
    %819 = vmatpush2.bf16.msra.mxu0 0
    %820 = vmatprep.subr.bf16.mxu0 0
    %821 = vmatpush2.bf16.msra.mxu0 0
    %822 = vmatprep.subr.bf16.mxu0 0
    %823 = vmatpush2.bf16.msra.mxu0 0
    %824 = vmatprep.mubr.bf16.mxu0 0
    %825 = vmatmul.mubr.bf16.gmra.mxu0 %v787
    %v826 = vpop.f32.mrf.mxu0
    %v827 = vadd.f32 0.0, %v826
    %v828 = vpop.f32.mrf.mxu0
    %v829 = vpop.f32.mrf.mxu0
    %v830 = vpop.f32.mrf.mxu0
    %831 = vdwg.mxu0
    %v833 = vsel %vm458, %v519, 0
    %v836 = vsel %vm558, %v79, 0
    %838 = vmatprep.subr.bf16.mxu0 0
    %839 = vmatpush1.bf16.msra.mxu0 0
    %840 = vmatprep.subr.bf16.mxu0 0
    %841 = vmatpush1.bf16.msra.mxu0 0
    %842 = vmatprep.subr.bf16.mxu0 0
    %843 = vmatpush1.bf16.msra.mxu0 0
    %844 = vmatprep.subr.bf16.mxu0 0
    %845 = vmatpush1.bf16.msra.mxu0 0
    %846 = vmatprep.subr.bf16.mxu0 0
    %847 = vmatpush1.bf16.msra.mxu0 0
    %848 = vmatprep.subr.bf16.mxu0 0
    %849 = vmatpush1.bf16.msra.mxu0 0
    %850 = vmatprep.subr.bf16.mxu0 0
    %851 = vmatpush1.bf16.msra.mxu0 0
    %852 = vmatprep.subr.bf16.mxu0 0
    %853 = vmatpush1.bf16.msra.mxu0 %v836
    %854 = vmatprep.subr.bf16.mxu0 0
    %855 = vmatpush2.bf16.msra.mxu0 0
    %856 = vmatprep.subr.bf16.mxu0 0
    %857 = vmatpush2.bf16.msra.mxu0 0
    %858 = vmatprep.subr.bf16.mxu0 0
    %859 = vmatpush2.bf16.msra.mxu0 0
    %860 = vmatprep.subr.bf16.mxu0 0
    %861 = vmatpush2.bf16.msra.mxu0 0
    %862 = vmatprep.subr.bf16.mxu0 0
    %863 = vmatpush2.bf16.msra.mxu0 0
    %864 = vmatprep.subr.bf16.mxu0 0
    %865 = vmatpush2.bf16.msra.mxu0 0
    %866 = vmatprep.subr.bf16.mxu0 0
    %867 = vmatpush2.bf16.msra.mxu0 0
    %868 = vmatprep.subr.bf16.mxu0 0
    %869 = vmatpush2.bf16.msra.mxu0 0
    %870 = vmatprep.mubr.bf16.mxu0 0
    %871 = vmatmul.mubr.bf16.gmra.mxu0 %v833
    %v872 = vpop.f32.mrf.mxu0
    %v873 = vadd.f32 0.0, %v872
    %v874 = vpop.f32.mrf.mxu0
    %v875 = vpop.f32.mrf.mxu0
    %v876 = vpop.f32.mrf.mxu0
    %877 = vdwg.mxu0
    %v879 = vsel %vm458, %v522, 0
    %v882 = vsel %vm558, %v80, 0
    %884 = vmatprep.subr.bf16.mxu0 0
    %885 = vmatpush1.bf16.msra.mxu0 0
    %886 = vmatprep.subr.bf16.mxu0 0
    %887 = vmatpush1.bf16.msra.mxu0 0
    %888 = vmatprep.subr.bf16.mxu0 0
    %889 = vmatpush1.bf16.msra.mxu0 0
    %890 = vmatprep.subr.bf16.mxu0 0
    %891 = vmatpush1.bf16.msra.mxu0 0
    %892 = vmatprep.subr.bf16.mxu0 0
    %893 = vmatpush1.bf16.msra.mxu0 0
    %894 = vmatprep.subr.bf16.mxu0 0
    %895 = vmatpush1.bf16.msra.mxu0 0
    %896 = vmatprep.subr.bf16.mxu0 0
    %897 = vmatpush1.bf16.msra.mxu0 0
    %898 = vmatprep.subr.bf16.mxu0 0
    %899 = vmatpush1.bf16.msra.mxu0 %v882
    %900 = vmatprep.subr.bf16.mxu0 0
    %901 = vmatpush2.bf16.msra.mxu0 0
    %902 = vmatprep.subr.bf16.mxu0 0
    %903 = vmatpush2.bf16.msra.mxu0 0
    %904 = vmatprep.subr.bf16.mxu0 0
    %905 = vmatpush2.bf16.msra.mxu0 0
    %906 = vmatprep.subr.bf16.mxu0 0
    %907 = vmatpush2.bf16.msra.mxu0 0
    %908 = vmatprep.subr.bf16.mxu0 0
    %909 = vmatpush2.bf16.msra.mxu0 0
    %910 = vmatprep.subr.bf16.mxu0 0
    %911 = vmatpush2.bf16.msra.mxu0 0
    %912 = vmatprep.subr.bf16.mxu0 0
    %913 = vmatpush2.bf16.msra.mxu0 0
    %914 = vmatprep.subr.bf16.mxu0 0
    %915 = vmatpush2.bf16.msra.mxu0 0
    %916 = vmatprep.mubr.bf16.mxu0 0
    %917 = vmatmul.mubr.bf16.gmra.mxu0 %v879
    %v918 = vpop.f32.mrf.mxu0
    %v919 = vadd.f32 0.0, %v918
    %v920 = vpop.f32.mrf.mxu0
    %v921 = vpop.f32.mrf.mxu0
    %v922 = vpop.f32.mrf.mxu0
    %923 = vdwg.mxu0
    %v924 = vrcp.pop %v533
    %v925 = vrcp.pop %v536
    %v926 = vrcp.pop %v539
    %v927 = vrcp.pop %v542
    %v928 = vrcp.pop %v545
    %v929 = vrcp.pop %v548
    %v930 = vrcp.pop %v551
    %v931 = vrcp.pop %v554
    %v932 = vmul.f32 %v597, %v924
    %v933 = vmul.f32 %v643, %v925
    %v934 = vmul.f32 %v689, %v926
    %v935 = vmul.f32 %v735, %v927
    %v936 = vmul.f32 %v781, %v928
    %v937 = vmul.f32 %v827, %v929
    %v938 = vmul.f32 %v873, %v930
    %v939 = vmul.f32 %v919, %v931
    %940 = vst.msk [vmem:[#allocation8] sm:$0xff] %vm81, %v932
    %941 = vst.msk [vmem:[#allocation8 + $0x8] sm:$0xff] %vm81, %v933
    %942 = vst.msk [vmem:[#allocation8 + $0x10] sm:$0xff] %vm81, %v934
    %943 = vst.msk [vmem:[#allocation8 + $0x18] sm:$0xff] %vm81, %v935
    %944 = vst.msk [vmem:[#allocation8 + $0x20] sm:$0xff] %vm81, %v936
    %945 = vst.msk [vmem:[#allocation8 + $0x28] sm:$0xff] %vm81, %v937
    %946 = vst.msk [vmem:[#allocation8 + $0x30] sm:$0xff] %vm81, %v938
    %947 = vst.msk [vmem:[#allocation8 + $0x38] sm:$0xff] %vm81, %v939
    // Predicated region
    $region26: #{tpu_custom_call.1} parent=1 // pred_check
      _
    $region27: #{tpu_custom_call.1} parent=1 // pred_check_branch
      %949 = sbr.rel (0) target = $region29
    $region28: #{tpu_custom_call.1} parent=1 // pred_region
      %s951 = ssub.s32 1024, 1024
      %952 = vsyncadd [#allocation4], %s951
      %s953 = sshll.u32 [#allocation8], 4
      %s954 = int_to_ptr.vmem [resolvable:$true] %s953
      %959 = dma.vmem_to_hbm [thread:$0]  %s954, 1024, %s3, [#allocation4], 128, 128, 8
    $region29: #{tpu_custom_call.1} parent=1 // pred_fallthru
      _
    // Predicated region
    $region30: #{tpu_custom_call.1} parent=1 // pred_check
      _
    $region31: #{tpu_custom_call.1} parent=1 // pred_check_branch
      %961 = sbr.rel (0) target = $region33
    $region32: #{tpu_custom_call.1} parent=1 // pred_region
      %962 = dma.done [#allocation4], 1024
    $region33: #{tpu_custom_call.1} parent=1 // pred_fallthru
      _
    %963 = vsyncpa [#allocation3], 1
    %964 = vsyncpa [#allocation6], 1
    %965 = vsyncpa [#allocation4], 1

</llo_original>
